<compile_context>
chip_gen: v7x
topology: tpu7x:2x2x1
jax: 0.10.0
libtpu: 0.0.40
codegen_flags: <defaults>
</compile_context>

<pallas_src>
import math
import functools

import jax
import jax.numpy as jnp
from jax import lax
from jax.experimental import pallas as pl
from jax.experimental.pallas import tpu as pltpu


# --------------------------------------------------------------------------
# In-kernel attention core (shared by the self- and cross-attention kernels)
# --------------------------------------------------------------------------

def _attention_into(ctx_ref, q, k, v, mask, *, n_heads, d_head, mxu_dtype,
                    scale):
    """Per-head scaled dot-product attention on packed slabs.

    q: (Tq, D) f32 (projected queries), k/v: (Sk, D) f32 (projected keys /
    values), mask: (1, Sk) int (nonzero = keep).  Each head's context is
    written into ctx_ref (a (Tq, D) f32 VMEM scratch) at its lane offset.
    """
    # Hoisted out of the head loop: additive mask bias and query pre-scale.
    add_bias = jnp.where(mask != 0, 0.0, -1e9).astype(jnp.float32)  # (1, Sk)
    qs = (q * jnp.float32(scale)).astype(mxu_dtype)                 # (Tq, D)
    kb = k.astype(mxu_dtype)                                        # (Sk, D)
    vb = v.astype(mxu_dtype)                                        # (Sk, D)

    # TODO(synk): consider one batched 'hqd,hkd->hqk' einsum over heads to
    # keep the MXU pipeline full between per-head softmaxes.
    for h in range(n_heads):
        sl = slice(h * d_head, (h + 1) * d_head)
        # scores = q_h @ k_h^T (contract last dims directly, no transpose).
        s = lax.dot_general(qs[:, sl], kb[:, sl], (((1,), (1,)), ((), ())),
                            preferred_element_type=jnp.float32)     # (Tq, Sk)
        s = s + add_bias
        m = jnp.max(s, axis=-1, keepdims=True)
        p = jnp.exp(s - m)                                           # f32
        denom = jnp.sum(p, axis=-1, keepdims=True)                   # (Tq, 1)
        ctx = jnp.dot(p.astype(mxu_dtype), vb[:, sl],
                      preferred_element_type=jnp.float32)            # (Tq, Dh)
        # Normalize after the PV matmul via the EUP reciprocal; store this
        # head's lanes directly into the scratch (no concat, no live vregs).
        ctx_ref[:, sl] = ctx * pl.reciprocal(denom, approx=True)


# --------------------------------------------------------------------------
# Fused MHA kernels
# --------------------------------------------------------------------------

def _mha_self_kernel(xq_ref, xkv_ref, m_ref, wqkv_ref, bqkv_ref, wo_ref,
                     bo_ref, o_ref, ctx_ref, *, n_heads, d_head, scale,
                     mxu_dtype):
    """Self-attention: fused QKV projection + attention + out projection."""
    d_model = n_heads * d_head
    xq = xq_ref[0].astype(mxu_dtype)        # (Tq, D)  query rows of this tile
    xkv = xkv_ref[0].astype(mxu_dtype)      # (Sk, D)  full key/value rows
    wqkv = wqkv_ref[...].astype(mxu_dtype)  # (D, 3D)  (already bf16 on host)

    q = jnp.dot(xq, wqkv[:, :d_model],
                preferred_element_type=jnp.float32) + bqkv_ref[:, :d_model]
    kv = jnp.dot(xkv, wqkv[:, d_model:],
                 preferred_element_type=jnp.float32) + bqkv_ref[:, d_model:]

    _attention_into(ctx_ref, q, kv[:, :d_model], kv[:, d_model:], m_ref[0],
                    n_heads=n_heads, d_head=d_head, scale=scale,
                    mxu_dtype=mxu_dtype)

    out = jnp.dot(ctx_ref[...].astype(mxu_dtype), wo_ref[...].astype(mxu_dtype),
                  preferred_element_type=jnp.float32) + bo_ref[...]
    o_ref[0] = out.astype(o_ref.dtype)


def _mha_cross_kernel(q_ref, k_ref, v_ref, m_ref,
                      wq_ref, bq_ref, wk_ref, bk_ref, wv_ref, bv_ref,
                      wo_ref, bo_ref, o_ref, ctx_ref, *, n_heads, d_head,
                      scale, mxu_dtype):
    """General (cross-attention) path: distinct query/key/value inputs."""
    def proj(x_ref, w_ref, b_ref):
        return jnp.dot(x_ref[0].astype(mxu_dtype), w_ref[...].astype(mxu_dtype),
                       preferred_element_type=jnp.float32) + b_ref[...]

    q = proj(q_ref, wq_ref, bq_ref)
    k = proj(k_ref, wk_ref, bk_ref)
    v = proj(v_ref, wv_ref, bv_ref)

    _attention_into(ctx_ref, q, k, v, m_ref[0],
                    n_heads=n_heads, d_head=d_head, scale=scale,
                    mxu_dtype=mxu_dtype)

    out = jnp.dot(ctx_ref[...].astype(mxu_dtype), wo_ref[...].astype(mxu_dtype),
                  preferred_element_type=jnp.float32) + bo_ref[...]
    o_ref[0] = out.astype(o_ref.dtype)


# --------------------------------------------------------------------------
# Wrapper
# --------------------------------------------------------------------------

def multi_headed_attention(query, key, value, mask, params, n_heads, *,
                           q_tile=256, mxu_dtype=jnp.bfloat16):
    """Forward of the PyTorch MultiHeadedAttention module.

    query/key/value: (B, S, D); mask: (B, Sk) int (nonzero = keep) or None.
    q_tile ~256 is a good v7x default; ~512 is fine on v6e/v5e.
    """
    B, Sq, D = query.shape
    Sk = key.shape[1]
    assert D % n_heads == 0
    d_head = D // n_heads
    scale = 1.0 / math.sqrt(d_head)

    if mask is None:
        mask = jnp.ones((B, Sk), jnp.int32)
    mask3 = mask.reshape(B, 1, Sk).astype(jnp.int32)

    tq = Sq if Sq <= q_tile else q_tile
    n_q_tiles = pl.cdiv(Sq, tq)

    cparams = pltpu.CompilerParams(
        dimension_semantics=("parallel", "parallel"),
        vmem_limit_bytes=64 * 1024 * 1024)

    weight_spec = lambda shape: pl.BlockSpec(shape, lambda b, i: (0, 0))

    # NOTE: dispatch on object identity routes equal-but-distinct arrays to
    # the (slower but equivalent) cross-attention path.
    if (query is key) and (key is value):
        kernel = functools.partial(_mha_self_kernel, n_heads=n_heads,
                                   d_head=d_head, scale=scale,
                                   mxu_dtype=mxu_dtype)
        return pl.pallas_call(
            kernel,
            out_shape=jax.ShapeDtypeStruct((B, Sq, D), query.dtype),
            grid=(B, n_q_tiles),
            in_specs=[
                pl.BlockSpec((1, tq, D), lambda b, i: (b, i, 0)),   # x (q rows)
                pl.BlockSpec((1, Sk, D), lambda b, i: (b, 0, 0)),   # x (kv rows)
                pl.BlockSpec((1, 1, Sk), lambda b, i: (b, 0, 0)),   # mask
                weight_spec((D, 3 * D)),                            # wqkv
                weight_spec((1, 3 * D)),                            # bqkv
                weight_spec((D, D)),                                # wo
                weight_spec((1, D)),                                # bo
            ],
            out_specs=pl.BlockSpec((1, tq, D), lambda b, i: (b, i, 0)),
            scratch_shapes=[pltpu.VMEM((tq, D), jnp.float32)],
            compiler_params=cparams,
        )(query, query, mask3, params["wqkv"], params["bqkv"],
          params["wo_t"], params["bo"])

    kernel = functools.partial(_mha_cross_kernel, n_heads=n_heads,
                               d_head=d_head, scale=scale,
                               mxu_dtype=mxu_dtype)
    return pl.pallas_call(
        kernel,
        out_shape=jax.ShapeDtypeStruct((B, Sq, D), query.dtype),
        grid=(B, n_q_tiles),
        in_specs=[
            pl.BlockSpec((1, tq, D), lambda b, i: (b, i, 0)),       # query
            pl.BlockSpec((1, Sk, D), lambda b, i: (b, 0, 0)),       # key
            pl.BlockSpec((1, Sk, D), lambda b, i: (b, 0, 0)),       # value
            pl.BlockSpec((1, 1, Sk), lambda b, i: (b, 0, 0)),       # mask
            weight_spec((D, D)), weight_spec((1, D)),               # wq, bq
            weight_spec((D, D)), weight_spec((1, D)),               # wk, bk
            weight_spec((D, D)), weight_spec((1, D)),               # wv, bv
            weight_spec((D, D)), weight_spec((1, D)),               # wo, bo
        ],
        out_specs=pl.BlockSpec((1, tq, D), lambda b, i: (b, i, 0)),
        scratch_shapes=[pltpu.VMEM((tq, D), jnp.float32)],
        compiler_params=cparams,
    )(query, key, value, mask3,
      params["wq_t"], params["bq"], params["wk_t"], params["bk"],
      params["wv_t"], params["bv"], params["wo_t"], params["bo"])


# --------------------------------------------------------------------------
# Parameters (torch nn.Linear layout) + one-time host-side preparation
# --------------------------------------------------------------------------

def init_mha_params(key, d_model):
    """Torch-layout params: weight (out, in), bias (out,)."""
    keys = jax.random.split(key, 4)

    def lin(k):
        w = (1.0 / math.sqrt(d_model)) * jax.random.normal(
            k, (d_model, d_model), jnp.float32)
        b = 0.01 * jax.random.normal(jax.random.fold_in(k, 1),
                                     (d_model,), jnp.float32)
        return w, b

    wq, bq = lin(keys[0]); wk, bk = lin(keys[1])
    wv, bv = lin(keys[2]); wo, bo = lin(keys[3])
    return dict(wq=wq, bq=bq, wk=wk, bk=bk, wv=wv, bv=bv, wo=wo, bo=bo)


def prepare_params(p, mxu_dtype=jnp.bfloat16):
    """Pre-transpose weights once to [in, out], pre-cast them to the MXU
    dtype (bf16), and fuse Q/K/V into a single [D, 3D] weight.  Biases stay
    f32 (they add into the f32 accumulator)."""
    D = p["wq"].shape[0]
    wq_t, wk_t, wv_t, wo_t = (p[n].T.astype(mxu_dtype)
                              for n in ("wq", "wk", "wv", "wo"))
    return dict(
        wqkv=jnp.concatenate([wq_t, wk_t, wv_t], axis=1),            # (D, 3D)
        bqkv=jnp.concatenate([p["bq"], p["bk"], p["bv"]]).reshape(1, 3 * D),
        wq_t=wq_t, bq=p["bq"].reshape(1, D),
        wk_t=wk_t, bk=p["bk"].reshape(1, D),
        wv_t=wv_t, bv=p["bv"].reshape(1, D),
        wo_t=wo_t, bo=p["bo"].reshape(1, D),
    )


# --------------------------------------------------------------------------
# Pure-JAX f32 reference (module-faithful, for correctness check)
# --------------------------------------------------------------------------

def mha_reference(query, key, value, mask, raw, n_heads):
    B, Sq, D = query.shape
    Sk = key.shape[1]
    dh = D // n_heads
    hp = lax.Precision.HIGHEST

    def lin(x, w, b):
        return jnp.einsum("bsd,od->bso", x, w, precision=hp) + b

    def split(x, S):
        return x.reshape(B, S, n_heads, dh).transpose(0, 2, 1, 3)

    q = split(lin(query, raw["wq"], raw["bq"]), Sq)
    k = split(lin(key, raw["wk"], raw["bk"]), Sk)
    v = split(lin(value, raw["wv"], raw["bv"]), Sk)
    s = jnp.einsum("bhqd,bhkd->bhqk", q, k, precision=hp) / math.sqrt(dh)
    if mask is not None:
        s = jnp.where(mask[:, None, None, :] != 0, s, -1e9)
    p = jax.nn.softmax(s, axis=-1)
    ctx = jnp.einsum("bhqk,bhkd->bhqd", p, v, precision=hp)
    ctx = ctx.transpose(0, 2, 1, 3).reshape(B, Sq, D)
    return jnp.einsum("bsd,od->bso", ctx, raw["wo"], precision=hp) + raw["bo"]


# --------------------------------------------------------------------------
# Main
# --------------------------------------------------------------------------

if __name__ == "__main__":
    # D is a multiple of 128 so activations/outputs are lane-dense.
    B, S, D, H = 2, 16, 128, 4

    root = jax.random.PRNGKey(0)
    kx, ky, kp = jax.random.split(root, 3)
    x = jax.random.normal(kx, (B, S, D), jnp.float32)
    y = jax.random.normal(ky, (B, S, D), jnp.float32)

    # padding mask: batch 0 fully valid, batch 1 last 4 key positions padded
    mask = jnp.ones((B, S), jnp.int32).at[1, -4:].set(0)

    raw = init_mha_params(kp, D)
    params = prepare_params(raw)

    # Tolerance: the kernel uses bf16 MXU operands (f32 accumulation) and an
    # approximate EUP reciprocal; the reference is full f32, so a few-percent
    # relative deviation (outputs are O(0.5)) is expected and accepted.
    TOL = 4e-2

    # Self-attention path (fused QKV kernel).
    out = multi_headed_attention(x, x, x, mask, params, H)
    out = jax.block_until_ready(out)
    assert out.shape == (B, S, D)
    assert bool(jnp.all(jnp.isfinite(out)))
    ref = mha_reference(x, x, x, mask, raw, H)
    err = float(jnp.max(jnp.abs(out - ref)))
    assert err < TOL, f"self-attention max abs err {err}"

    # Cross-attention path (general kernel).
    out_c = multi_headed_attention(x, y, y, mask, params, H)
    out_c = jax.block_until_ready(out_c)
    assert out_c.shape == (B, S, D)
    ref_c = mha_reference(x, y, y, mask, raw, H)
    err_c = float(jnp.max(jnp.abs(out_c - ref_c)))
    assert err_c < TOL, f"cross-attention max abs err {err_c}"

    print("KERNEL_OK")
</pallas_src>

<mosaic_0001>
module attributes {stable_mosaic.version = 11 : i64} {
  func.func @_mha_self_kernel(%arg0: i32, %arg1: i32, %arg2: memref<1x16x128xf32, #tpu.memory_space<vmem>>, %arg3: memref<1x16x128xf32, #tpu.memory_space<vmem>>, %arg4: memref<1x1x16xi32, #tpu.memory_space<vmem>>, %arg5: memref<128x384xbf16, #tpu.memory_space<vmem>>, %arg6: memref<1x384xf32, #tpu.memory_space<vmem>>, %arg7: memref<128x128xbf16, #tpu.memory_space<vmem>>, %arg8: memref<1x128xf32, #tpu.memory_space<vmem>>, %arg9: memref<1x16x128xf32, #tpu.memory_space<vmem>>, %arg10: memref<16x128xf32, #tpu.memory_space<vmem>>) attributes {dimension_semantics = [#tpu.dimension_semantics<parallel>, #tpu.dimension_semantics<parallel>], iteration_bounds = array<i64: 2, 1>, scalar_prefetch = 0 : i64, scratch_operands = 1 : i64, tpu.core_type = #tpu.core_type<tc>, window_params = [{transform_indices = @transform_0, window_bounds = array<i64: 1, 16, 128>}, {transform_indices = @transform_1, window_bounds = array<i64: 1, 16, 128>}, {transform_indices = @transform_2, window_bounds = array<i64: 1, 1, 16>}, {pipeline_mode = #tpu.pipeline_mode<synchronous>, transform_indices = @transform_3, window_bounds = array<i64: 128, 384>}, {pipeline_mode = #tpu.pipeline_mode<synchronous>, transform_indices = @transform_4, window_bounds = array<i64: 1, 384>}, {pipeline_mode = #tpu.pipeline_mode<synchronous>, transform_indices = @transform_5, window_bounds = array<i64: 128, 128>}, {pipeline_mode = #tpu.pipeline_mode<synchronous>, transform_indices = @transform_6, window_bounds = array<i64: 1, 128>}, {transform_indices = @transform_7, window_bounds = array<i64: 1, 16, 128>}]} {
    %c0 = arith.constant 0 : index
    %c0_0 = arith.constant 0 : index
    %c0_1 = arith.constant 0 : index
    %0 = vector.load %arg2[%c0, %c0_0, %c0_1] : memref<1x16x128xf32, #tpu.memory_space<vmem>>, vector<1x16x128xf32>
    %1 = vector.shape_cast %0 : vector<1x16x128xf32> to vector<16x128xf32>
    %2 = arith.truncf %1 : vector<16x128xf32> to vector<16x128xbf16>
    %c0_2 = arith.constant 0 : index
    %c0_3 = arith.constant 0 : index
    %c0_4 = arith.constant 0 : index
    %3 = vector.load %arg3[%c0_2, %c0_3, %c0_4] : memref<1x16x128xf32, #tpu.memory_space<vmem>>, vector<1x16x128xf32>
    %4 = vector.shape_cast %3 : vector<1x16x128xf32> to vector<16x128xf32>
    %5 = arith.truncf %4 : vector<16x128xf32> to vector<16x128xbf16>
    %c0_5 = arith.constant 0 : index
    %c0_6 = arith.constant 0 : index
    %6 = vector.load %arg5[%c0_5, %c0_6] : memref<128x384xbf16, #tpu.memory_space<vmem>>, vector<128x384xbf16>
    %7 = vector.extract_strided_slice %6 {offsets = [0, 0], sizes = [128, 128], strides = [1, 1]} : vector<128x384xbf16> to vector<128x128xbf16>
    %cst = arith.constant dense<0.000000e+00> : vector<16x128xf32>
    %8 = tpu.matmul %2, %7, %cst {dimension_numbers = #tpu.dot_dimension_numbers<[1], [0], [0], [1], [0, 0, 1, 1], [], []>} : vector<16x128xbf16>, vector<128x128xbf16>, vector<16x128xf32> -> vector<16x128xf32>
    %c0_7 = arith.constant 0 : index
    %c0_8 = arith.constant 0 : index
    %9 = vector.load %arg6[%c0_7, %c0_8] : memref<1x384xf32, #tpu.memory_space<vmem>>, vector<1x128xf32>
    %10 = vector.broadcast %9 : vector<1x128xf32> to vector<16x128xf32>
    %11 = arith.addf %8, %10 : vector<16x128xf32>
    %12 = vector.extract_strided_slice %6 {offsets = [0, 128], sizes = [128, 256], strides = [1, 1]} : vector<128x384xbf16> to vector<128x256xbf16>
    %cst_9 = arith.constant dense<0.000000e+00> : vector<16x256xf32>
    %13 = tpu.matmul %5, %12, %cst_9 {dimension_numbers = #tpu.dot_dimension_numbers<[1], [0], [0], [1], [0, 0, 1, 1], [], []>} : vector<16x128xbf16>, vector<128x256xbf16>, vector<16x256xf32> -> vector<16x256xf32>
    %c0_10 = arith.constant 0 : index
    %c128 = arith.constant 128 : index
    %14 = vector.load %arg6[%c0_10, %c128] : memref<1x384xf32, #tpu.memory_space<vmem>>, vector<1x256xf32>
    %15 = vector.broadcast %14 : vector<1x256xf32> to vector<16x256xf32>
    %16 = arith.addf %13, %15 : vector<16x256xf32>
    %17 = vector.extract_strided_slice %16 {offsets = [0, 0], sizes = [16, 128], strides = [1, 1]} : vector<16x256xf32> to vector<16x128xf32>
    %18 = vector.extract_strided_slice %16 {offsets = [0, 128], sizes = [16, 128], strides = [1, 1]} : vector<16x256xf32> to vector<16x128xf32>
    %c0_11 = arith.constant 0 : index
    %c0_12 = arith.constant 0 : index
    %c0_13 = arith.constant 0 : index
    %19 = vector.load %arg4[%c0_11, %c0_12, %c0_13] : memref<1x1x16xi32, #tpu.memory_space<vmem>>, vector<1x1x16xi32>
    %20 = vector.shape_cast %19 : vector<1x1x16xi32> to vector<1x16xi32>
    %c0_i32 = arith.constant 0 : i32
    %21 = vector.broadcast %c0_i32 : i32 to vector<1x16xi32>
    %22 = arith.cmpi ne, %20, %21 : vector<1x16xi32>
    %cst_14 = arith.constant 0.000000e+00 : f32
    %cst_15 = arith.constant -1.000000e+09 : f32
    %23 = vector.broadcast %cst_14 : f32 to vector<1x16xf32>
    %24 = vector.broadcast %cst_15 : f32 to vector<1x16xf32>
    %25 = arith.select %22, %23, %24 : vector<1x16xi1>, vector<1x16xf32>
    %cst_16 = arith.constant 0.176776692 : f32
    %26 = vector.broadcast %cst_16 : f32 to vector<16x128xf32>
    %27 = arith.mulf %11, %26 : vector<16x128xf32>
    %28 = arith.truncf %27 : vector<16x128xf32> to vector<16x128xbf16>
    %29 = arith.truncf %17 : vector<16x128xf32> to vector<16x128xbf16>
    %30 = arith.truncf %18 : vector<16x128xf32> to vector<16x128xbf16>
    %31 = vector.extract_strided_slice %28 {offsets = [0, 0], sizes = [16, 32], strides = [1, 1]} : vector<16x128xbf16> to vector<16x32xbf16>
    %32 = vector.extract_strided_slice %29 {offsets = [0, 0], sizes = [16, 32], strides = [1, 1]} : vector<16x128xbf16> to vector<16x32xbf16>
    %cst_17 = arith.constant dense<0.000000e+00> : vector<16x16xf32>
    %33 = tpu.matmul %31, %32, %cst_17 {dimension_numbers = #tpu.dot_dimension_numbers<[1], [1], [0], [0], [0, 0, 1, 0], [], []>} : vector<16x32xbf16>, vector<16x32xbf16>, vector<16x16xf32> -> vector<16x16xf32>
    %34 = vector.broadcast %25 : vector<1x16xf32> to vector<16x16xf32>
    %35 = arith.addf %33, %34 : vector<16x16xf32>
    %cst_18 = arith.constant dense<0xFF800000> : vector<16xf32>
    %36 = vector.multi_reduction <maximumf>, %35, %cst_18 [1] : vector<16x16xf32> to vector<16xf32>
    %37 = vector.shape_cast %36 : vector<16xf32> to vector<16x1xf32>
    %38 = vector.broadcast %37 : vector<16x1xf32> to vector<16x16xf32>
    %39 = arith.subf %35, %38 : vector<16x16xf32>
    %40 = math.exp %39 : vector<16x16xf32>
    %cst_19 = arith.constant dense<0.000000e+00> : vector<16xf32>
    %41 = vector.multi_reduction <add>, %40, %cst_19 [1] : vector<16x16xf32> to vector<16xf32>
    %42 = vector.shape_cast %41 : vector<16xf32> to vector<16x1xf32>
    %43 = arith.truncf %40 : vector<16x16xf32> to vector<16x16xbf16>
    %44 = vector.extract_strided_slice %30 {offsets = [0, 0], sizes = [16, 32], strides = [1, 1]} : vector<16x128xbf16> to vector<16x32xbf16>
    %cst_20 = arith.constant dense<0.000000e+00> : vector<16x32xf32>
    %45 = tpu.matmul %43, %44, %cst_20 {dimension_numbers = #tpu.dot_dimension_numbers<[1], [0], [0], [1], [0, 0, 1, 1], [], []>} : vector<16x16xbf16>, vector<16x32xbf16>, vector<16x32xf32> -> vector<16x32xf32>
    %46 = tpu.reciprocal %42 {approx = true} : vector<16x1xf32> -> vector<16x1xf32>
    %47 = vector.broadcast %46 : vector<16x1xf32> to vector<16x32xf32>
    %48 = arith.mulf %45, %47 : vector<16x32xf32>
    %c0_21 = arith.constant 0 : index
    %c0_22 = arith.constant 0 : index
    %49 = vector.load %arg10[%c0_21, %c0_22] : memref<16x128xf32, #tpu.memory_space<vmem>>, vector<16x32xf32>
    tpu.vector_store %arg10[%c0_21, %c0_22], %48 {strides = array<i32>} : memref<16x128xf32, #tpu.memory_space<vmem>>, vector<16x32xf32>,
    %50 = vector.extract_strided_slice %28 {offsets = [0, 32], sizes = [16, 32], strides = [1, 1]} : vector<16x128xbf16> to vector<16x32xbf16>
    %51 = vector.extract_strided_slice %29 {offsets = [0, 32], sizes = [16, 32], strides = [1, 1]} : vector<16x128xbf16> to vector<16x32xbf16>
    %cst_23 = arith.constant dense<0.000000e+00> : vector<16x16xf32>
    %52 = tpu.matmul %50, %51, %cst_23 {dimension_numbers = #tpu.dot_dimension_numbers<[1], [1], [0], [0], [0, 0, 1, 0], [], []>} : vector<16x32xbf16>, vector<16x32xbf16>, vector<16x16xf32> -> vector<16x16xf32>
    %53 = vector.broadcast %25 : vector<1x16xf32> to vector<16x16xf32>
    %54 = arith.addf %52, %53 : vector<16x16xf32>
    %cst_24 = arith.constant dense<0xFF800000> : vector<16xf32>
    %55 = vector.multi_reduction <maximumf>, %54, %cst_24 [1] : vector<16x16xf32> to vector<16xf32>
    %56 = vector.shape_cast %55 : vector<16xf32> to vector<16x1xf32>
    %57 = vector.broadcast %56 : vector<16x1xf32> to vector<16x16xf32>
    %58 = arith.subf %54, %57 : vector<16x16xf32>
    %59 = math.exp %58 : vector<16x16xf32>
    %cst_25 = arith.constant dense<0.000000e+00> : vector<16xf32>
    %60 = vector.multi_reduction <add>, %59, %cst_25 [1] : vector<16x16xf32> to vector<16xf32>
    %61 = vector.shape_cast %60 : vector<16xf32> to vector<16x1xf32>
    %62 = arith.truncf %59 : vector<16x16xf32> to vector<16x16xbf16>
    %63 = vector.extract_strided_slice %30 {offsets = [0, 32], sizes = [16, 32], strides = [1, 1]} : vector<16x128xbf16> to vector<16x32xbf16>
    %cst_26 = arith.constant dense<0.000000e+00> : vector<16x32xf32>
    %64 = tpu.matmul %62, %63, %cst_26 {dimension_numbers = #tpu.dot_dimension_numbers<[1], [0], [0], [1], [0, 0, 1, 1], [], []>} : vector<16x16xbf16>, vector<16x32xbf16>, vector<16x32xf32> -> vector<16x32xf32>
    %65 = tpu.reciprocal %61 {approx = true} : vector<16x1xf32> -> vector<16x1xf32>
    %66 = vector.broadcast %65 : vector<16x1xf32> to vector<16x32xf32>
    %67 = arith.mulf %64, %66 : vector<16x32xf32>
    %c0_27 = arith.constant 0 : index
    %c32 = arith.constant 32 : index
    %68 = vector.load %arg10[%c0_27, %c32] : memref<16x128xf32, #tpu.memory_space<vmem>>, vector<16x32xf32>
    tpu.vector_store %arg10[%c0_27, %c32], %67 {strides = array<i32>} : memref<16x128xf32, #tpu.memory_space<vmem>>, vector<16x32xf32>,
    %69 = vector.extract_strided_slice %28 {offsets = [0, 64], sizes = [16, 32], strides = [1, 1]} : vector<16x128xbf16> to vector<16x32xbf16>
    %70 = vector.extract_strided_slice %29 {offsets = [0, 64], sizes = [16, 32], strides = [1, 1]} : vector<16x128xbf16> to vector<16x32xbf16>
    %cst_28 = arith.constant dense<0.000000e+00> : vector<16x16xf32>
    %71 = tpu.matmul %69, %70, %cst_28 {dimension_numbers = #tpu.dot_dimension_numbers<[1], [1], [0], [0], [0, 0, 1, 0], [], []>} : vector<16x32xbf16>, vector<16x32xbf16>, vector<16x16xf32> -> vector<16x16xf32>
    %72 = vector.broadcast %25 : vector<1x16xf32> to vector<16x16xf32>
    %73 = arith.addf %71, %72 : vector<16x16xf32>
    %cst_29 = arith.constant dense<0xFF800000> : vector<16xf32>
    %74 = vector.multi_reduction <maximumf>, %73, %cst_29 [1] : vector<16x16xf32> to vector<16xf32>
    %75 = vector.shape_cast %74 : vector<16xf32> to vector<16x1xf32>
    %76 = vector.broadcast %75 : vector<16x1xf32> to vector<16x16xf32>
    %77 = arith.subf %73, %76 : vector<16x16xf32>
    %78 = math.exp %77 : vector<16x16xf32>
    %cst_30 = arith.constant dense<0.000000e+00> : vector<16xf32>
    %79 = vector.multi_reduction <add>, %78, %cst_30 [1] : vector<16x16xf32> to vector<16xf32>
    %80 = vector.shape_cast %79 : vector<16xf32> to vector<16x1xf32>
    %81 = arith.truncf %78 : vector<16x16xf32> to vector<16x16xbf16>
    %82 = vector.extract_strided_slice %30 {offsets = [0, 64], sizes = [16, 32], strides = [1, 1]} : vector<16x128xbf16> to vector<16x32xbf16>
    %cst_31 = arith.constant dense<0.000000e+00> : vector<16x32xf32>
    %83 = tpu.matmul %81, %82, %cst_31 {dimension_numbers = #tpu.dot_dimension_numbers<[1], [0], [0], [1], [0, 0, 1, 1], [], []>} : vector<16x16xbf16>, vector<16x32xbf16>, vector<16x32xf32> -> vector<16x32xf32>
    %84 = tpu.reciprocal %80 {approx = true} : vector<16x1xf32> -> vector<16x1xf32>
    %85 = vector.broadcast %84 : vector<16x1xf32> to vector<16x32xf32>
    %86 = arith.mulf %83, %85 : vector<16x32xf32>
    %c0_32 = arith.constant 0 : index
    %c64 = arith.constant 64 : index
    %87 = vector.load %arg10[%c0_32, %c64] : memref<16x128xf32, #tpu.memory_space<vmem>>, vector<16x32xf32>
    tpu.vector_store %arg10[%c0_32, %c64], %86 {strides = array<i32>} : memref<16x128xf32, #tpu.memory_space<vmem>>, vector<16x32xf32>,
    %88 = vector.extract_strided_slice %28 {offsets = [0, 96], sizes = [16, 32], strides = [1, 1]} : vector<16x128xbf16> to vector<16x32xbf16>
    %89 = vector.extract_strided_slice %29 {offsets = [0, 96], sizes = [16, 32], strides = [1, 1]} : vector<16x128xbf16> to vector<16x32xbf16>
    %cst_33 = arith.constant dense<0.000000e+00> : vector<16x16xf32>
    %90 = tpu.matmul %88, %89, %cst_33 {dimension_numbers = #tpu.dot_dimension_numbers<[1], [1], [0], [0], [0, 0, 1, 0], [], []>} : vector<16x32xbf16>, vector<16x32xbf16>, vector<16x16xf32> -> vector<16x16xf32>
    %91 = vector.broadcast %25 : vector<1x16xf32> to vector<16x16xf32>
    %92 = arith.addf %90, %91 : vector<16x16xf32>
    %cst_34 = arith.constant dense<0xFF800000> : vector<16xf32>
    %93 = vector.multi_reduction <maximumf>, %92, %cst_34 [1] : vector<16x16xf32> to vector<16xf32>
    %94 = vector.shape_cast %93 : vector<16xf32> to vector<16x1xf32>
    %95 = vector.broadcast %94 : vector<16x1xf32> to vector<16x16xf32>
    %96 = arith.subf %92, %95 : vector<16x16xf32>
    %97 = math.exp %96 : vector<16x16xf32>
    %cst_35 = arith.constant dense<0.000000e+00> : vector<16xf32>
    %98 = vector.multi_reduction <add>, %97, %cst_35 [1] : vector<16x16xf32> to vector<16xf32>
    %99 = vector.shape_cast %98 : vector<16xf32> to vector<16x1xf32>
    %100 = arith.truncf %97 : vector<16x16xf32> to vector<16x16xbf16>
    %101 = vector.extract_strided_slice %30 {offsets = [0, 96], sizes = [16, 32], strides = [1, 1]} : vector<16x128xbf16> to vector<16x32xbf16>
    %cst_36 = arith.constant dense<0.000000e+00> : vector<16x32xf32>
    %102 = tpu.matmul %100, %101, %cst_36 {dimension_numbers = #tpu.dot_dimension_numbers<[1], [0], [0], [1], [0, 0, 1, 1], [], []>} : vector<16x16xbf16>, vector<16x32xbf16>, vector<16x32xf32> -> vector<16x32xf32>
    %103 = tpu.reciprocal %99 {approx = true} : vector<16x1xf32> -> vector<16x1xf32>
    %104 = vector.broadcast %103 : vector<16x1xf32> to vector<16x32xf32>
    %105 = arith.mulf %102, %104 : vector<16x32xf32>
    %c0_37 = arith.constant 0 : index
    %c96 = arith.constant 96 : index
    %106 = vector.load %arg10[%c0_37, %c96] : memref<16x128xf32, #tpu.memory_space<vmem>>, vector<16x32xf32>
    tpu.vector_store %arg10[%c0_37, %c96], %105 {strides = array<i32>} : memref<16x128xf32, #tpu.memory_space<vmem>>, vector<16x32xf32>,
    %c0_38 = arith.constant 0 : index
    %c0_39 = arith.constant 0 : index
    %107 = vector.load %arg10[%c0_38, %c0_39] : memref<16x128xf32, #tpu.memory_space<vmem>>, vector<16x128xf32>
    %108 = arith.truncf %107 : vector<16x128xf32> to vector<16x128xbf16>
    %c0_40 = arith.constant 0 : index
    %c0_41 = arith.constant 0 : index
    %109 = vector.load %arg7[%c0_40, %c0_41] : memref<128x128xbf16, #tpu.memory_space<vmem>>, vector<128x128xbf16>
    %cst_42 = arith.constant dense<0.000000e+00> : vector<16x128xf32>
    %110 = tpu.matmul %108, %109, %cst_42 {dimension_numbers = #tpu.dot_dimension_numbers<[1], [0], [0], [1], [0, 0, 1, 1], [], []>} : vector<16x128xbf16>, vector<128x128xbf16>, vector<16x128xf32> -> vector<16x128xf32>
    %c0_43 = arith.constant 0 : index
    %c0_44 = arith.constant 0 : index
    %111 = vector.load %arg8[%c0_43, %c0_44] : memref<1x128xf32, #tpu.memory_space<vmem>>, vector<1x128xf32>
    %112 = vector.broadcast %111 : vector<1x128xf32> to vector<16x128xf32>
    %113 = arith.addf %110, %112 : vector<16x128xf32>
    %c0_45 = arith.constant 0 : index
    %c0_46 = arith.constant 0 : index
    %c0_47 = arith.constant 0 : index
    %114 = vector.load %arg9[%c0_45, %c0_46, %c0_47] : memref<1x16x128xf32, #tpu.memory_space<vmem>>, vector<1x16x128xf32>
    %115 = vector.shape_cast %114 : vector<1x16x128xf32> to vector<16x128xf32>
    %116 = vector.shape_cast %113 : vector<16x128xf32> to vector<1x16x128xf32>
    tpu.vector_store %arg9[%c0_45, %c0_46, %c0_47], %116 {strides = array<i32>} : memref<1x16x128xf32, #tpu.memory_space<vmem>>, vector<1x16x128xf32>,
    return
  }
  func.func @transform_0(%arg0: i32, %arg1: i32) -> (i32, i32, i32) {
    %c0_i32 = arith.constant 0 : i32
    %c0_i32_0 = arith.constant 0 : i32
    return %arg0, %arg1, %c0_i32 : i32, i32, i32
  }
  func.func @transform_1(%arg0: i32, %arg1: i32) -> (i32, i32, i32) {
    %c0_i32 = arith.constant 0 : i32
    %c0_i32_0 = arith.constant 0 : i32
    %c0_i32_1 = arith.constant 0 : i32
    return %arg0, %c0_i32, %c0_i32_0 : i32, i32, i32
  }
  func.func @transform_2(%arg0: i32, %arg1: i32) -> (i32, i32, i32) {
    %c0_i32 = arith.constant 0 : i32
    %c0_i32_0 = arith.constant 0 : i32
    %c0_i32_1 = arith.constant 0 : i32
    return %arg0, %c0_i32, %c0_i32_0 : i32, i32, i32
  }
  func.func @transform_3(%arg0: i32, %arg1: i32) -> (i32, i32) {
    %c0_i32 = arith.constant 0 : i32
    %c0_i32_0 = arith.constant 0 : i32
    %c0_i32_1 = arith.constant 0 : i32
    return %c0_i32, %c0_i32_0 : i32, i32
  }
  func.func @transform_4(%arg0: i32, %arg1: i32) -> (i32, i32) {
    %c0_i32 = arith.constant 0 : i32
    %c0_i32_0 = arith.constant 0 : i32
    %c0_i32_1 = arith.constant 0 : i32
    return %c0_i32, %c0_i32_0 : i32, i32
  }
  func.func @transform_5(%arg0: i32, %arg1: i32) -> (i32, i32) {
    %c0_i32 = arith.constant 0 : i32
    %c0_i32_0 = arith.constant 0 : i32
    %c0_i32_1 = arith.constant 0 : i32
    return %c0_i32, %c0_i32_0 : i32, i32
  }
  func.func @transform_6(%arg0: i32, %arg1: i32) -> (i32, i32) {
    %c0_i32 = arith.constant 0 : i32
    %c0_i32_0 = arith.constant 0 : i32
    %c0_i32_1 = arith.constant 0 : i32
    return %c0_i32, %c0_i32_0 : i32, i32
  }
  func.func @transform_7(%arg0: i32, %arg1: i32) -> (i32, i32, i32) {
    %c0_i32 = arith.constant 0 : i32
    %c0_i32_0 = arith.constant 0 : i32
    return %arg0, %arg1, %c0_i32 : i32, i32, i32
  }
}

</mosaic_0001>

<llo_original>
// kernel: tpu_custom_call.1
$region0: #{tpu_custom_call.1}
  #allocation0 [shape = 'u32[]', space=smem, size = 0x4, offset = 0x4, fixed_abs, tag = 'smem constant byte address 0x4 - core index']
  #allocation1 [shape = 'u32[144,128]{1,0:T(1,128)}', space=vmem, size = 0x12000, scoped, tag = 'internal scratch']
  #allocation2 [shape = 'f32[16,128]{1,0:T(8,128)}', space=vmem, size = 0x2000, scoped, tag = 'scratch operand']
  %s0 = inlined_call_operand.hbm [shape: f32[2,16,128], index: 0, kind: input, shape index: {}]
  %s1 = inlined_call_operand.hbm [shape: f32[2,16,128], index: 1, kind: input, shape index: {}]
  %s2 = inlined_call_operand.hbm [shape: s32[2,1,16], index: 2, kind: input, shape index: {}]
  %s3 = inlined_call_operand.hbm [shape: bf16[128,384], index: 3, kind: input, shape index: {}]
  %s4 = inlined_call_operand.hbm [shape: f32[1,384], index: 4, kind: input, shape index: {}]
  %s5 = inlined_call_operand.hbm [shape: bf16[128,128], index: 5, kind: input, shape index: {}]
  %s6 = inlined_call_operand.hbm [shape: f32[1,128], index: 6, kind: input, shape index: {}]
  %s7 = inlined_call_operand.hbm [shape: f32[2,16,128], index: 7, kind: output, shape index: {}]
  %s8 = sld [smem:[#allocation0]]
  $region89: #{tpu_custom_call.1} parent=0
    _
  %s10 = ssub.s32 1, %s8
  %s11 = scalar_select 0, %s10, %s8
  $region1: #{tpu_custom_call.1} parent=0
    #allocation3 [shape = 'u8[16384]{0}', space=vmem, size = 0x4000, scoped, tag = 'input window, operand 0']
    #allocation4 [shape = 's32[2]{0}', space=sflag, size = 0x8, scoped, tag = 'scoped memory for tpu_custom_call.1']
    #allocation5 [shape = 's32[2]{0}', space=sflag, size = 0x8, scoped, tag = 'scoped memory for tpu_custom_call.1']
    #allocation6 [shape = 'u8[16384]{0}', space=vmem, size = 0x4000, scoped, tag = 'input window, operand 1']
    #allocation7 [shape = 's32[2]{0}', space=sflag, size = 0x8, scoped, tag = 'scoped memory for tpu_custom_call.1']
    #allocation8 [shape = 'u8[1024]{0}', space=vmem, size = 0x400, scoped, tag = 'input window, operand 2']
    #allocation9 [shape = 'u8[98304]{0}', space=vmem, size = 0x18000, scoped, tag = 'input window, operand 3, single buffered']
    #allocation10 [shape = 's32[1]{0}', space=sflag, size = 0x4, scoped, tag = 'scoped memory for tpu_custom_call.1']
    #allocation11 [shape = 'u8[1536]{0}', space=vmem, size = 0x800, scoped, tag = 'input window, operand 4, single buffered']
    #allocation12 [shape = 'u8[32768]{0}', space=vmem, size = 0x8000, scoped, tag = 'input window, operand 5, single buffered']
    #allocation13 [shape = 's32[1]{0}', space=sflag, size = 0x4, scoped, tag = 'scoped memory for tpu_custom_call.1']
    #allocation14 [shape = 'u8[512]{0}', space=vmem, size = 0x400, scoped, tag = 'input window, operand 6, single buffered']
    #allocation15 [shape = 'u8[16384]{0}', space=vmem, size = 0x4000, scoped, tag = 'output window, operand 0']
    %12 = vsyncpa [#allocation4], 0
    %s13 = scalar_lea.sflag [#allocation4], 1
    %14 = vsyncpa %s13, 0
    %15 = vsyncpa [#allocation7], 0
    %s16 = scalar_lea.sflag [#allocation7], 1
    %17 = vsyncpa %s16, 0
    %18 = vsyncpa [#allocation10], 0
    %19 = vsyncpa [#allocation13], 0
    %20 = vsyncpa [#allocation5], 0
    %s21 = scalar_lea.sflag [#allocation5], 1
    %22 = vsyncpa %s21, 0
    loop: start=0, step=1, limit=4
    $region2: #{tpu_custom_call.1} parent=1 // loop_pre_header
      _
    $region3: #{tpu_custom_call.1} parent=1 // loop_header
      %s24 = sphi 0, %s28
      %p25 = scmp.ge.s32.totalorder %s24, 4
      %s31 = sphi 0, %s43
      %s32 = sphi 0, %s39
      %s33 = sphi 0, %s31
      %s34 = sphi 0, %s32
      %s35 = sphi 0, %s33
      %s36 = sphi 0, %s34
      %s48 = sphi 0, %s50
      %s51 = sphi 0, %s48
      %s52 = sphi 0, %s51
      %s68 = sphi 0, %s52
      %s74 = sphi 0, %s76
      %s77 = sphi 0, %s74
      %s78 = sphi 0, %s77
      %s94 = sphi 0, %s78
      %s100 = sphi 0, %s102
      %s103 = sphi 0, %s100
      %s104 = sphi 0, %s103
      %s120 = sphi 0, %s104
      %s124 = sphi 0, %s124
      %s126 = sphi 0, %s124
      %s127 = sphi 0, %s126
      %s141 = sphi 0, %s127
      %s145 = sphi 0, %s145
      %s147 = sphi 0, %s145
      %s148 = sphi 0, %s147
      %s162 = sphi 0, %s148
      %s166 = sphi 0, %s166
      %s168 = sphi 0, %s166
      %s169 = sphi 0, %s168
      %s183 = sphi 0, %s169
      %s187 = sphi 0, %s187
      %s189 = sphi 0, %s187
      %s190 = sphi 0, %s189
      %s204 = sphi 0, %s190
      %s212 = sphi 0, %s214
      %s215 = sphi 0, %s212
      %s216 = sphi 0, %s215
      %s232 = sphi 0, %s216
    $region4: #{tpu_custom_call.1} parent=1 // loop_header_branch
      %27 = sbr.rel (%p25) target = $region8
    $region5: #{tpu_custom_call.1} parent=1 // loop_body
      %s29 = ssub.s32 %s24, 1
      %s30 = ssub.s32 %s24, 2
      %s37 = sadd.s32 1, %s32
      %p38 = scmp.ge.s32.totalorder %s37, 1
      %s39 = scalar_select %p38, 0, %s37
      %s40 = sadd.s32 1, %s31
      %s41 = scalar_select %p38, %s40, %s31
      %p42 = scmp.ge.s32.totalorder %s41, 2
      %s43 = scalar_select %p42, 0, %s41
      %s44 = ssub.s32 %s31, %s43
      %s45 = ssub.s32 %s32, %s39
      %s46 = sor.u32 %s44, %s45
      %p47 = scmp.eq.s32.totalorder %s46, 0
      %s49 = sadd.s32 %s48, 1
      %s50 = scalar_select %p47, %s48, %s49
      %p53 = pneg %p47
      %p54 = scmp.eq.s32.totalorder %s24, 1
      %p55 = por %p53, %p54
      %p56 = scmp.ne.s32.totalorder %s48, %s51
      %p57 = scmp.eq.s32.totalorder %s24, 0
      %p58 = por %p56, %p57
      %p59 = scmp.ne.s32.totalorder %s48, %s51
      %p60 = scmp.eq.s32.totalorder %s29, 1
      %p61 = por %p59, %p60
      %p62 = scmp.ne.s32.totalorder %s51, %s52
      %p63 = scmp.eq.s32.totalorder %s29, 0
      %p64 = por %p62, %p63
      %p65 = scmp.ne.s32.totalorder %s51, %s52
      %p66 = scmp.eq.s32.totalorder %s30, 1
      %p67 = por %p65, %p66
      %p69 = scmp.ne.s32.totalorder %s52, %s68
      %p70 = scmp.eq.s32.totalorder %s30, 0
      %p71 = por %p69, %p70
      %s72 = ssub.s32 %s31, %s43
      %p73 = scmp.eq.s32.totalorder %s72, 0
      %s75 = sadd.s32 %s74, 1
      %s76 = scalar_select %p73, %s74, %s75
      %p79 = pneg %p73
      %p80 = scmp.eq.s32.totalorder %s24, 1
      %p81 = por %p79, %p80
      %p82 = scmp.ne.s32.totalorder %s74, %s77
      %p83 = scmp.eq.s32.totalorder %s24, 0
      %p84 = por %p82, %p83
      %p85 = scmp.ne.s32.totalorder %s74, %s77
      %p86 = scmp.eq.s32.totalorder %s29, 1
      %p87 = por %p85, %p86
      %p88 = scmp.ne.s32.totalorder %s77, %s78
      %p89 = scmp.eq.s32.totalorder %s29, 0
      %p90 = por %p88, %p89
      %p91 = scmp.ne.s32.totalorder %s77, %s78
      %p92 = scmp.eq.s32.totalorder %s30, 1
      %p93 = por %p91, %p92
      %p95 = scmp.ne.s32.totalorder %s78, %s94
      %p96 = scmp.eq.s32.totalorder %s30, 0
      %p97 = por %p95, %p96
      %s98 = ssub.s32 %s31, %s43
      %p99 = scmp.eq.s32.totalorder %s98, 0
      %s101 = sadd.s32 %s100, 1
      %s102 = scalar_select %p99, %s100, %s101
      %p105 = pneg %p99
      %p106 = scmp.eq.s32.totalorder %s24, 1
      %p107 = por %p105, %p106
      %p108 = scmp.ne.s32.totalorder %s100, %s103
      %p109 = scmp.eq.s32.totalorder %s24, 0
      %p110 = por %p108, %p109
      %p111 = scmp.ne.s32.totalorder %s100, %s103
      %p112 = scmp.eq.s32.totalorder %s29, 1
      %p113 = por %p111, %p112
      %p114 = scmp.ne.s32.totalorder %s103, %s104
      %p115 = scmp.eq.s32.totalorder %s29, 0
      %p116 = por %p114, %p115
      %p117 = scmp.ne.s32.totalorder %s103, %s104
      %p118 = scmp.eq.s32.totalorder %s30, 1
      %p119 = por %p117, %p118
      %p121 = scmp.ne.s32.totalorder %s104, %s120
      %p122 = scmp.eq.s32.totalorder %s30, 0
      %p123 = por %p121, %p122
      %s125 = sadd.s32 %s124, 1
      %p128 = scmp.eq.s32.totalorder %s24, 1
      %p129 = scmp.ne.s32.totalorder %s124, %s126
      %p130 = scmp.eq.s32.totalorder %s24, 0
      %p131 = por %p129, %p130
      %p132 = scmp.ne.s32.totalorder %s124, %s126
      %p133 = scmp.eq.s32.totalorder %s29, 1
      %p134 = por %p132, %p133
      %p135 = scmp.ne.s32.totalorder %s126, %s127
      %p136 = scmp.eq.s32.totalorder %s29, 0
      %p137 = por %p135, %p136
      %p138 = scmp.ne.s32.totalorder %s126, %s127
      %p139 = scmp.eq.s32.totalorder %s30, 1
      %p140 = por %p138, %p139
      %p142 = scmp.ne.s32.totalorder %s127, %s141
      %p143 = scmp.eq.s32.totalorder %s30, 0
      %p144 = por %p142, %p143
      %s146 = sadd.s32 %s145, 1
      %p149 = scmp.eq.s32.totalorder %s24, 1
      %p150 = scmp.ne.s32.totalorder %s145, %s147
      %p151 = scmp.eq.s32.totalorder %s24, 0
      %p152 = por %p150, %p151
      %p153 = scmp.ne.s32.totalorder %s145, %s147
      %p154 = scmp.eq.s32.totalorder %s29, 1
      %p155 = por %p153, %p154
      %p156 = scmp.ne.s32.totalorder %s147, %s148
      %p157 = scmp.eq.s32.totalorder %s29, 0
      %p158 = por %p156, %p157
      %p159 = scmp.ne.s32.totalorder %s147, %s148
      %p160 = scmp.eq.s32.totalorder %s30, 1
      %p161 = por %p159, %p160
      %p163 = scmp.ne.s32.totalorder %s148, %s162
      %p164 = scmp.eq.s32.totalorder %s30, 0
      %p165 = por %p163, %p164
      %s167 = sadd.s32 %s166, 1
      %p170 = scmp.eq.s32.totalorder %s24, 1
      %p171 = scmp.ne.s32.totalorder %s166, %s168
      %p172 = scmp.eq.s32.totalorder %s24, 0
      %p173 = por %p171, %p172
      %p174 = scmp.ne.s32.totalorder %s166, %s168
      %p175 = scmp.eq.s32.totalorder %s29, 1
      %p176 = por %p174, %p175
      %p177 = scmp.ne.s32.totalorder %s168, %s169
      %p178 = scmp.eq.s32.totalorder %s29, 0
      %p179 = por %p177, %p178
      %p180 = scmp.ne.s32.totalorder %s168, %s169
      %p181 = scmp.eq.s32.totalorder %s30, 1
      %p182 = por %p180, %p181
      %p184 = scmp.ne.s32.totalorder %s169, %s183
      %p185 = scmp.eq.s32.totalorder %s30, 0
      %p186 = por %p184, %p185
      %s188 = sadd.s32 %s187, 1
      %p191 = scmp.eq.s32.totalorder %s24, 1
      %p192 = scmp.ne.s32.totalorder %s187, %s189
      %p193 = scmp.eq.s32.totalorder %s24, 0
      %p194 = por %p192, %p193
      %p195 = scmp.ne.s32.totalorder %s187, %s189
      %p196 = scmp.eq.s32.totalorder %s29, 1
      %p197 = por %p195, %p196
      %p198 = scmp.ne.s32.totalorder %s189, %s190
      %p199 = scmp.eq.s32.totalorder %s29, 0
      %p200 = por %p198, %p199
      %p201 = scmp.ne.s32.totalorder %s189, %s190
      %p202 = scmp.eq.s32.totalorder %s30, 1
      %p203 = por %p201, %p202
      %p205 = scmp.ne.s32.totalorder %s190, %s204
      %p206 = scmp.eq.s32.totalorder %s30, 0
      %p207 = por %p205, %p206
      %s208 = ssub.s32 %s31, %s43
      %s209 = ssub.s32 %s32, %s39
      %s210 = sor.u32 %s208, %s209
      %p211 = scmp.eq.s32.totalorder %s210, 0
      %s213 = sadd.s32 %s212, 1
      %s214 = scalar_select %p211, %s212, %s213
      %p217 = pneg %p211
      %p218 = scmp.eq.s32.totalorder %s24, 1
      %p219 = por %p217, %p218
      %p220 = scmp.ne.s32.totalorder %s212, %s215
      %p221 = scmp.eq.s32.totalorder %s24, 0
      %p222 = por %p220, %p221
      %p223 = scmp.ne.s32.totalorder %s212, %s215
      %p224 = scmp.eq.s32.totalorder %s29, 1
      %p225 = por %p223, %p224
      %p226 = scmp.ne.s32.totalorder %s215, %s216
      %p227 = scmp.eq.s32.totalorder %s29, 0
      %p228 = por %p226, %p227
      %p229 = scmp.ne.s32.totalorder %s215, %s216
      %p230 = scmp.eq.s32.totalorder %s30, 1
      %p231 = por %p229, %p230
      %p233 = scmp.ne.s32.totalorder %s216, %s232
      %p234 = scmp.eq.s32.totalorder %s30, 0
      %p235 = por %p233, %p234
      %p236 = scmp.le.s32.totalorder 1, %s24
      %p237 = scmp.lt.s32.totalorder %s24, 3
      %p238 = pnand %p236, %p237
      %p239 = pneg %p238
      // Predicated region
      $region9: #{tpu_custom_call.1} parent=5 // pred_check
        _
      $region10: #{tpu_custom_call.1} parent=5 // pred_check_branch
        %241 = sbr.rel (%p238) target = $region12
      $region11: #{tpu_custom_call.1} parent=5 // pred_region
        %s242 = ssub.s32 %s24, 1
        // Predicated region
        $region13: #{tpu_custom_call.1} parent=11 // pred_check
          %p243 = pneg %p137
        $region14: #{tpu_custom_call.1} parent=11 // pred_check_branch
          %245 = sbr.rel (%p243) target = $region16
        $region15: #{tpu_custom_call.1} parent=11 // pred_region
          %s247 = ssub.s32 3072, 3072
          %248 = vsyncadd [#allocation10], %s247
          %s249 = sshll.u32 [#allocation9], 4
          %s250 = int_to_ptr.vmem [resolvable:$true] %s249
          %255 = dma.hbm_to_vmem [thread:$0]  %s3, 3072, %s250, [#allocation10], 192, 192, 12
        $region16: #{tpu_custom_call.1} parent=11 // pred_fallthru
          _
        // Predicated region
        $region17: #{tpu_custom_call.1} parent=11 // pred_check
          %p256 = pneg %p158
        $region18: #{tpu_custom_call.1} parent=11 // pred_check_branch
          %258 = sbr.rel (%p256) target = $region20
        $region19: #{tpu_custom_call.1} parent=11 // pred_region
          %s260 = ssub.s32 48, 48
          %261 = vsyncadd [#allocation10], %s260
          %s263 = sshll.u32 [#allocation11], 4
          %s264 = int_to_ptr.vmem [resolvable:$true] %s263
          %266 = dma.hbm_to_vmem [thread:$0]  %s4, 48, %s264, [#allocation10]
        $region20: #{tpu_custom_call.1} parent=11 // pred_fallthru
          _
        // Predicated region
        $region21: #{tpu_custom_call.1} parent=11 // pred_check
          %p267 = pneg %p179
        $region22: #{tpu_custom_call.1} parent=11 // pred_check_branch
          %269 = sbr.rel (%p267) target = $region24
        $region23: #{tpu_custom_call.1} parent=11 // pred_region
          %s271 = ssub.s32 1024, 1024
          %272 = vsyncadd [#allocation13], %s271
          %s273 = sshll.u32 [#allocation12], 4
          %s274 = int_to_ptr.vmem [resolvable:$true] %s273
          %279 = dma.hbm_to_vmem [thread:$0]  %s5, 1024, %s274, [#allocation13], 64, 64, 4
        $region24: #{tpu_custom_call.1} parent=11 // pred_fallthru
          _
        // Predicated region
        $region25: #{tpu_custom_call.1} parent=11 // pred_check
          %p280 = pneg %p200
        $region26: #{tpu_custom_call.1} parent=11 // pred_check_branch
          %282 = sbr.rel (%p280) target = $region28
        $region27: #{tpu_custom_call.1} parent=11 // pred_region
          %s284 = ssub.s32 16, 16
          %285 = vsyncadd [#allocation13], %s284
          %s287 = sshll.u32 [#allocation14], 4
          %s288 = int_to_ptr.vmem [resolvable:$true] %s287
          %290 = dma.hbm_to_vmem [thread:$0]  %s6, 16, %s288, [#allocation13]
        $region28: #{tpu_custom_call.1} parent=11 // pred_fallthru
          _
      $region12: #{tpu_custom_call.1} parent=5 // pred_fallthru
        _
      %p291 = scmp.lt.s32.totalorder %s24, 2
      // Predicated region
      $region29: #{tpu_custom_call.1} parent=5 // pred_check
        %p292 = pneg %p291
      $region30: #{tpu_custom_call.1} parent=5 // pred_check_branch
        %294 = sbr.rel (%p292) target = $region32
      $region31: #{tpu_custom_call.1} parent=5 // pred_region
        // Predicated region
        $region33: #{tpu_custom_call.1} parent=31 // pred_check
          %p295 = pneg %p58
        $region34: #{tpu_custom_call.1} parent=31 // pred_check_branch
          %297 = sbr.rel (%p295) target = $region36
        $region35: #{tpu_custom_call.1} parent=31 // pred_region
          %s298 = sand.u32 %s48, 1
          %s299 = scalar_lea.sflag [#allocation4], %s298
          %s300 = sand.u32 %s48, 1
          %s301 = smul.addr %s300, 16
          %s302 = scalar_lea.vmem [#allocation3], %s301
          %s303 = smul.u32 2, %s32
          %s305 = ssub.s32 256, 256
          %306 = vsyncadd %s299, %s305
          %s307 = smul.addr %s31, 2
          %s308 = sadd.s32 %s303, %s307
          %s309 = smul.addr %s308, 128
          %s310 = scalar_lea.hbm %s0, %s309
          %s311 = sshll.u32 %s302, 4
          %s312 = int_to_ptr.vmem [resolvable:$true] %s311
          %317 = dma.hbm_to_vmem [thread:$0]  %s310, 256, %s312, %s299, 128, 128, 8
        $region36: #{tpu_custom_call.1} parent=31 // pred_fallthru
          _
        // Predicated region
        $region37: #{tpu_custom_call.1} parent=31 // pred_check
          %p318 = pneg %p84
        $region38: #{tpu_custom_call.1} parent=31 // pred_check_branch
          %320 = sbr.rel (%p318) target = $region40
        $region39: #{tpu_custom_call.1} parent=31 // pred_region
          %s321 = sand.u32 %s24, 1
          %s322 = scalar_lea.sflag [#allocation7], %s321
          %s323 = sand.u32 %s74, 1
          %s324 = smul.addr %s323, 16
          %s325 = scalar_lea.vmem [#allocation6], %s324
          %s327 = ssub.s32 256, 256
          %328 = vsyncadd %s322, %s327
          %s329 = smul.addr %s31, 2
          %s330 = smul.addr %s329, 128
          %s331 = scalar_lea.hbm %s1, %s330
          %s332 = sshll.u32 %s325, 4
          %s333 = int_to_ptr.vmem [resolvable:$true] %s332
          %338 = dma.hbm_to_vmem [thread:$0]  %s331, 256, %s333, %s322, 128, 128, 8
        $region40: #{tpu_custom_call.1} parent=31 // pred_fallthru
          _
        // Predicated region
        $region41: #{tpu_custom_call.1} parent=31 // pred_check
          %p339 = pneg %p110
        $region42: #{tpu_custom_call.1} parent=31 // pred_check_branch
          %341 = sbr.rel (%p339) target = $region44
        $region43: #{tpu_custom_call.1} parent=31 // pred_region
          %s342 = sand.u32 %s24, 1
          %s343 = scalar_lea.sflag [#allocation7], %s342
          %s344 = sand.u32 %s100, 1
          %s345 = scalar_lea.vmem [#allocation8], %s344
          %s347 = ssub.s32 16, 16
          %348 = vsyncadd %s343, %s347
          %s349 = smul.addr %s31, 16
          %s350 = scalar_lea.hbm %s2, %s349
          %s352 = sshll.u32 %s345, 4
          %s353 = int_to_ptr.vmem [resolvable:$true] %s352
          %355 = dma.hbm_to_vmem [thread:$0]  %s350, 16, %s353, %s343
        $region44: #{tpu_custom_call.1} parent=31 // pred_fallthru
          _
      $region32: #{tpu_custom_call.1} parent=5 // pred_fallthru
        _
      %p356 = scmp.le.s32.totalorder 1, %s24
      %p357 = scmp.lt.s32.totalorder %s24, 3
      %p358 = pnand %p356, %p357
      %p359 = pneg %p358
      // Predicated region
      $region45: #{tpu_custom_call.1} parent=5 // pred_check
        _
      $region46: #{tpu_custom_call.1} parent=5 // pred_check_branch
        %361 = sbr.rel (%p358) target = $region48
      $region47: #{tpu_custom_call.1} parent=5 // pred_region
        %s362 = ssub.s32 %s24, 1
        %s363 = sand.u32 %s51, 1
        %s364 = scalar_lea.sflag [#allocation4], %s363
        %s365 = sand.u32 %s51, 1
        %s366 = smul.addr %s365, 16
        %s367 = scalar_lea.vmem [#allocation3], %s366
        // Predicated region
        $region49: #{tpu_custom_call.1} parent=47 // pred_check
          %p368 = pneg %p64
        $region50: #{tpu_custom_call.1} parent=47 // pred_check_branch
          %370 = sbr.rel (%p368) target = $region52
        $region51: #{tpu_custom_call.1} parent=47 // pred_region
          %371 = dma.done %s364, 256
        $region52: #{tpu_custom_call.1} parent=47 // pred_fallthru
          _
        %s372 = sand.u32 %s29, 1
        %s373 = scalar_lea.sflag [#allocation7], %s372
        %s374 = sand.u32 %s77, 1
        %s375 = smul.addr %s374, 16
        %s376 = scalar_lea.vmem [#allocation6], %s375
        // Predicated region
        $region53: #{tpu_custom_call.1} parent=47 // pred_check
          %p377 = pneg %p90
        $region54: #{tpu_custom_call.1} parent=47 // pred_check_branch
          %379 = sbr.rel (%p377) target = $region56
        $region55: #{tpu_custom_call.1} parent=47 // pred_region
          %380 = dma.done %s373, 256
        $region56: #{tpu_custom_call.1} parent=47 // pred_fallthru
          _
        %s381 = sand.u32 %s29, 1
        %s382 = scalar_lea.sflag [#allocation7], %s381
        %s383 = sand.u32 %s103, 1
        %s384 = scalar_lea.vmem [#allocation8], %s383
        // Predicated region
        $region57: #{tpu_custom_call.1} parent=47 // pred_check
          %p385 = pneg %p116
        $region58: #{tpu_custom_call.1} parent=47 // pred_check_branch
          %387 = sbr.rel (%p385) target = $region60
        $region59: #{tpu_custom_call.1} parent=47 // pred_region
          %388 = dma.done %s382, 16
        $region60: #{tpu_custom_call.1} parent=47 // pred_fallthru
          _
        // Predicated region
        $region61: #{tpu_custom_call.1} parent=47 // pred_check
          %p389 = pneg %p137
        $region62: #{tpu_custom_call.1} parent=47 // pred_check_branch
          %391 = sbr.rel (%p389) target = $region64
        $region63: #{tpu_custom_call.1} parent=47 // pred_region
          %392 = dma.done [#allocation10], 3072
        $region64: #{tpu_custom_call.1} parent=47 // pred_fallthru
          _
        // Predicated region
        $region65: #{tpu_custom_call.1} parent=47 // pred_check
          %p393 = pneg %p158
        $region66: #{tpu_custom_call.1} parent=47 // pred_check_branch
          %395 = sbr.rel (%p393) target = $region68
        $region67: #{tpu_custom_call.1} parent=47 // pred_region
          %396 = dma.done [#allocation10], 48
        $region68: #{tpu_custom_call.1} parent=47 // pred_fallthru
          _
        // Predicated region
        $region69: #{tpu_custom_call.1} parent=47 // pred_check
          %p397 = pneg %p179
        $region70: #{tpu_custom_call.1} parent=47 // pred_check_branch
          %399 = sbr.rel (%p397) target = $region72
        $region71: #{tpu_custom_call.1} parent=47 // pred_region
          %400 = dma.done [#allocation13], 1024
        $region72: #{tpu_custom_call.1} parent=47 // pred_fallthru
          _
        // Predicated region
        $region73: #{tpu_custom_call.1} parent=47 // pred_check
          %p401 = pneg %p200
        $region74: #{tpu_custom_call.1} parent=47 // pred_check_branch
          %403 = sbr.rel (%p401) target = $region76
        $region75: #{tpu_custom_call.1} parent=47 // pred_region
          %404 = dma.done [#allocation13], 16
        $region76: #{tpu_custom_call.1} parent=47 // pred_fallthru
          _
        %s405 = sand.u32 %s51, 1
        %s406 = scalar_lea.sflag [#allocation4], %s405
        %s407 = sand.u32 %s51, 1
        %s408 = smul.addr %s407, 16
        %s409 = scalar_lea.vmem [#allocation3], %s408
        %p410 = pneg %p64
        %p411 = pneg %p61
        %s412 = sand.u32 %s29, 1
        %s413 = scalar_lea.sflag [#allocation7], %s412
        %s414 = sand.u32 %s77, 1
        %s415 = smul.addr %s414, 16
        %s416 = scalar_lea.vmem [#allocation6], %s415
        %p417 = pneg %p90
        %p418 = pneg %p87
        %s419 = sand.u32 %s29, 1
        %s420 = scalar_lea.sflag [#allocation7], %s419
        %s421 = sand.u32 %s103, 1
        %s422 = scalar_lea.vmem [#allocation8], %s421
        %p423 = pneg %p116
        %p424 = pneg %p113
        %p425 = pneg %p137
        %p426 = pneg %p134
        %p427 = pneg %p158
        %p428 = pneg %p155
        %p429 = pneg %p179
        %p430 = pneg %p176
        %p431 = pneg %p200
        %p432 = pneg %p197
        %p433 = pneg %p228
        %p434 = pneg %p225
        %s435 = sand.u32 %s215, 1
        %s436 = scalar_lea.sflag [#allocation5], %s435
        %s437 = sand.u32 %s215, 1
        %s438 = smul.addr %s437, 16
        %s439 = scalar_lea.vmem [#allocation15], %s438
        %s440 = smul.u32 2, %s34
        %s441 = smul.u32 2, %s34
        %v443 = vld [vmem:[%s367] sm:$0xff]
        %v444 = vld [vmem:[%s367 + $0x8] sm:$0xff]
        %v445 = vpack.c.bf16 %v444, %v443
        %v446 = vld [vmem:[%s376] sm:$0xff]
        %v447 = vld [vmem:[%s376 + $0x8] sm:$0xff]
        %v448 = vpack.c.bf16 %v447, %v446
        %v449 = vld [vmem:[#allocation9] sm:$0xff]
        %v450 = vld [vmem:[#allocation9 + $0x8] sm:$0xf]
        %v451 = vld [vmem:[#allocation9 + $0xc] sm:$0xff]
        %v452 = vld [vmem:[#allocation9 + $0x14] sm:$0xf]
        %v453 = vld [vmem:[#allocation9 + $0x18] sm:$0xff]
        %v454 = vld [vmem:[#allocation9 + $0x20] sm:$0xf]
        %v455 = vld [vmem:[#allocation9 + $0x24] sm:$0xff]
        %v456 = vld [vmem:[#allocation9 + $0x2c] sm:$0xf]
        %v457 = vld [vmem:[#allocation9 + $0x30] sm:$0xff]
        %v458 = vld [vmem:[#allocation9 + $0x38] sm:$0xf]
        %v459 = vld [vmem:[#allocation9 + $0x3c] sm:$0xff]
        %v460 = vld [vmem:[#allocation9 + $0x44] sm:$0xf]
        %v461 = vld [vmem:[#allocation9 + $0x48] sm:$0xff]
        %v462 = vld [vmem:[#allocation9 + $0x50] sm:$0xf]
        %v463 = vld [vmem:[#allocation9 + $0x54] sm:$0xff]
        %v464 = vld [vmem:[#allocation9 + $0x5c] sm:$0xf]
        %v465 = vld [vmem:[#allocation9 + $0x60] sm:$0xff]
        %v466 = vld [vmem:[#allocation9 + $0x68] sm:$0xf]
        %v467 = vld [vmem:[#allocation9 + $0x6c] sm:$0xff]
        %v468 = vld [vmem:[#allocation9 + $0x74] sm:$0xf]
        %v469 = vld [vmem:[#allocation9 + $0x78] sm:$0xff]
        %v470 = vld [vmem:[#allocation9 + $0x80] sm:$0xf]
        %v471 = vld [vmem:[#allocation9 + $0x84] sm:$0xff]
        %v472 = vld [vmem:[#allocation9 + $0x8c] sm:$0xf]
        %v473 = vld [vmem:[#allocation9 + $0x90] sm:$0xff]
        %v474 = vld [vmem:[#allocation9 + $0x98] sm:$0xf]
        %v475 = vld [vmem:[#allocation9 + $0x9c] sm:$0xff]
        %v476 = vld [vmem:[#allocation9 + $0xa4] sm:$0xf]
        %v477 = vld [vmem:[#allocation9 + $0xa8] sm:$0xff]
        %v478 = vld [vmem:[#allocation9 + $0xb0] sm:$0xf]
        %v479 = vld [vmem:[#allocation9 + $0xb4] sm:$0xff]
        %v480 = vld [vmem:[#allocation9 + $0xbc] sm:$0xf]
        %v481 = vld [vmem:[#allocation11] sm:$0x1]
        %v483 = vlaneseq
        %v484 = vshrl.u32 %v483, 7
        %v485 = vsub.s32 0, %v484
        %v486 = vrot.slane %v481, %v485
        %v504 = vunpack.c.l.b16 %v449
        %v505 = vunpack.c.l.b16 %v451
        %v506 = vunpack.c.l.b16 %v453
        %v507 = vunpack.c.l.b16 %v455
        %v508 = vunpack.c.l.b16 %v457
        %v509 = vunpack.c.l.b16 %v459
        %v510 = vunpack.c.l.b16 %v461
        %v511 = vunpack.c.l.b16 %v463
        %v512 = vunpack.c.l.b16 %v465
        %v513 = vunpack.c.l.b16 %v467
        %v514 = vunpack.c.l.b16 %v469
        %v515 = vunpack.c.l.b16 %v471
        %v516 = vunpack.c.l.b16 %v473
        %v517 = vunpack.c.l.b16 %v475
        %v518 = vunpack.c.l.b16 %v477
        %v519 = vunpack.c.l.b16 %v479
        %v520 = vpack.c.b16 %v505, %v504
        %v521 = vpack.c.b16 %v507, %v506
        %v522 = vpack.c.b16 %v509, %v508
        %v523 = vpack.c.b16 %v511, %v510
        %v524 = vpack.c.b16 %v513, %v512
        %v525 = vpack.c.b16 %v515, %v514
        %v526 = vpack.c.b16 %v517, %v516
        %v527 = vpack.c.b16 %v519, %v518
        %536 = vmatprep.subr.bf16.mxu0 0
        %537 = vmatpush1.bf16.msra.mxu0 %v520
        %538 = vmatprep.subr.bf16.mxu0 0
        %539 = vmatpush1.bf16.msra.mxu0 %v521
        %540 = vmatprep.subr.bf16.mxu0 0
        %541 = vmatpush1.bf16.msra.mxu0 %v522
        %542 = vmatprep.subr.bf16.mxu0 0
        %543 = vmatpush1.bf16.msra.mxu0 %v523
        %544 = vmatprep.subr.bf16.mxu0 0
        %545 = vmatpush1.bf16.msra.mxu0 %v524
        %546 = vmatprep.subr.bf16.mxu0 0
        %547 = vmatpush1.bf16.msra.mxu0 %v525
        %548 = vmatprep.subr.bf16.mxu0 0
        %549 = vmatpush1.bf16.msra.mxu0 %v526
        %550 = vmatprep.subr.bf16.mxu0 0
        %551 = vmatpush1.bf16.msra.mxu0 %v527
        %552 = vmatprep.subr.bf16.mxu0 0
        %553 = vmatpush1.bf16.msra.mxu0 0
        %554 = vmatprep.subr.bf16.mxu0 0
        %555 = vmatpush1.bf16.msra.mxu0 0
        %556 = vmatprep.subr.bf16.mxu0 0
        %557 = vmatpush1.bf16.msra.mxu0 0
        %558 = vmatprep.subr.bf16.mxu0 0
        %559 = vmatpush1.bf16.msra.mxu0 0
        %560 = vmatprep.subr.bf16.mxu0 0
        %561 = vmatpush1.bf16.msra.mxu0 0
        %562 = vmatprep.subr.bf16.mxu0 0
        %563 = vmatpush1.bf16.msra.mxu0 0
        %564 = vmatprep.subr.bf16.mxu0 0
        %565 = vmatpush1.bf16.msra.mxu0 0
        %566 = vmatprep.subr.bf16.mxu0 0
        %567 = vmatpush1.bf16.msra.mxu0 0
        %568 = vmatprep.mubr.bf16.mxu0 0
        %569 = vmatmul.mubr.bf16.gmra.mrb[0].mxu0 %v445
        %v570 = vpop.f32.mrb[0].mxu0
        %v571 = vadd.f32 %v486, %v570
        %v572 = vpop.f32.mrb[0].mxu0
        %v573 = vpop.f32.mrb[0].mxu0
        %v574 = vadd.f32 %v486, %v573
        %v575 = vpop.f32.mrb[0].mxu0
        %576 = vdwg.mxu0
        %v577 = vld [vmem:[#allocation11 + $0x1] sm:$0x3]
        %v579 = vlaneseq
        %v580 = vshrl.u32 %v579, 7
        %v581 = vsub.s32 0, %v580
        %v582 = vrot.slane %v577, %v581
        %v583 = vlaneseq
        %v584 = vshrl.u32 %v583, 7
        %v585 = vsub.s32 1, %v584
        %v586 = vrot.slane %v577, %v585
        %v605 = vunpack.c.h.b16 %v449
        %v606 = vunpack.c.l.b16 %v450
        %v607 = vunpack.c.h.b16 %v451
        %v608 = vunpack.c.l.b16 %v452
        %v609 = vunpack.c.h.b16 %v453
        %v610 = vunpack.c.l.b16 %v454
        %v611 = vunpack.c.h.b16 %v455
        %v612 = vunpack.c.l.b16 %v456
        %v613 = vunpack.c.h.b16 %v457
        %v614 = vunpack.c.l.b16 %v458
        %v615 = vunpack.c.h.b16 %v459
        %v616 = vunpack.c.l.b16 %v460
        %v617 = vunpack.c.h.b16 %v461
        %v618 = vunpack.c.l.b16 %v462
        %v619 = vunpack.c.h.b16 %v463
        %v620 = vunpack.c.l.b16 %v464
        %v621 = vunpack.c.h.b16 %v465
        %v622 = vunpack.c.l.b16 %v466
        %v623 = vunpack.c.h.b16 %v467
        %v624 = vunpack.c.l.b16 %v468
        %v625 = vunpack.c.h.b16 %v469
        %v626 = vunpack.c.l.b16 %v470
        %v627 = vunpack.c.h.b16 %v471
        %v628 = vunpack.c.l.b16 %v472
        %v629 = vunpack.c.h.b16 %v473
        %v630 = vunpack.c.l.b16 %v474
        %v631 = vunpack.c.h.b16 %v475
        %v632 = vunpack.c.l.b16 %v476
        %v633 = vunpack.c.h.b16 %v477
        %v634 = vunpack.c.l.b16 %v478
        %v635 = vunpack.c.h.b16 %v479
        %v636 = vunpack.c.l.b16 %v480
        %v637 = vpack.c.b16 %v607, %v605
        %v638 = vpack.c.b16 %v608, %v606
        %v639 = vpack.c.b16 %v611, %v609
        %v640 = vpack.c.b16 %v612, %v610
        %v641 = vpack.c.b16 %v615, %v613
        %v642 = vpack.c.b16 %v616, %v614
        %v643 = vpack.c.b16 %v619, %v617
        %v644 = vpack.c.b16 %v620, %v618
        %v645 = vpack.c.b16 %v623, %v621
        %v646 = vpack.c.b16 %v624, %v622
        %v647 = vpack.c.b16 %v627, %v625
        %v648 = vpack.c.b16 %v628, %v626
        %v649 = vpack.c.b16 %v631, %v629
        %v650 = vpack.c.b16 %v632, %v630
        %v651 = vpack.c.b16 %v635, %v633
        %v652 = vpack.c.b16 %v636, %v634
        %669 = vmatprep.subr.bf16.mxu0 %v638
        %670 = vmatpush1.bf16.msra.mxu0 %v637
        %671 = vmatprep.subr.bf16.mxu0 %v640
        %672 = vmatpush1.bf16.msra.mxu0 %v639
        %673 = vmatprep.subr.bf16.mxu0 %v642
        %674 = vmatpush1.bf16.msra.mxu0 %v641
        %675 = vmatprep.subr.bf16.mxu0 %v644
        %676 = vmatpush1.bf16.msra.mxu0 %v643
        %677 = vmatprep.subr.bf16.mxu0 %v646
        %678 = vmatpush1.bf16.msra.mxu0 %v645
        %679 = vmatprep.subr.bf16.mxu0 %v648
        %680 = vmatpush1.bf16.msra.mxu0 %v647
        %681 = vmatprep.subr.bf16.mxu0 %v650
        %682 = vmatpush1.bf16.msra.mxu0 %v649
        %683 = vmatprep.subr.bf16.mxu0 %v652
        %684 = vmatpush1.bf16.msra.mxu0 %v651
        %685 = vmatprep.subr.bf16.mxu0 0
        %686 = vmatpush1.bf16.msra.mxu0 0
        %687 = vmatprep.subr.bf16.mxu0 0
        %688 = vmatpush1.bf16.msra.mxu0 0
        %689 = vmatprep.subr.bf16.mxu0 0
        %690 = vmatpush1.bf16.msra.mxu0 0
        %691 = vmatprep.subr.bf16.mxu0 0
        %692 = vmatpush1.bf16.msra.mxu0 0
        %693 = vmatprep.subr.bf16.mxu0 0
        %694 = vmatpush1.bf16.msra.mxu0 0
        %695 = vmatprep.subr.bf16.mxu0 0
        %696 = vmatpush1.bf16.msra.mxu0 0
        %697 = vmatprep.subr.bf16.mxu0 0
        %698 = vmatpush1.bf16.msra.mxu0 0
        %699 = vmatprep.subr.bf16.mxu0 0
        %700 = vmatpush1.bf16.msra.mxu0 0
        %701 = vmatprep.mubr.bf16.mxu0 0
        %702 = vmatmul.mubr.bf16.gmra.mrb[0].mxu0 %v448
        %v703 = vpop.f32.mrb[0].mxu0
        %v704 = vadd.f32 %v582, %v703
        %v705 = vpop.f32.mrb[0].mxu0
        %v706 = vadd.f32 %v586, %v705
        %v707 = vpop.f32.mrb[0].mxu0
        %v708 = vadd.f32 %v582, %v707
        %v709 = vpop.f32.mrb[0].mxu0
        %v710 = vadd.f32 %v586, %v709
        %711 = vdwg.mxu0
        %v712 = vld [vmem:[%s384] sm:$0x1]
        %vm713 = vcmp.ne.s32.totalorder %v712, 0
        %v714 = vsel %vm713, 0.0, -1e+09
        %v715 = vmul.f32 %v571, 0.17677669
        %v716 = vmul.f32 %v574, 0.17677669
        %v717 = vpack.c.bf16 %v716, %v715
        %v718 = vpack.c.bf16 %v708, %v704
        %v719 = vpack.c.bf16 %v710, %v706
        %v721 = vlaneseq
        %v722 = vshrl.u32 %v721, 7
        %v723 = vsub.s32 0, %v722
        %v724 = vrot.slane %v714, %v723
        %vm726 = vcmask 261120
        %v728 = vsel %vm726, %v717, 0
        %v731 = vsel %vm726, %v718, 0
        %733 = vmatprep.subr.bf16.mxu0 0
        %734 = vmatpush1.bf16.xpose.msra.mxu0 %v731
        %735 = vmatprep.subr.bf16.mxu0 0
        %736 = vmatpush1.bf16.xpose.msra.mxu0 0
        %737 = vmatprep.subr.bf16.mxu0 0
        %738 = vmatpush1.bf16.xpose.msra.mxu0 0
        %739 = vmatprep.subr.bf16.mxu0 0
        %740 = vmatpush1.bf16.xpose.msra.mxu0 0
        %741 = vmatprep.subr.bf16.mxu0 0
        %742 = vmatpush1.bf16.xpose.msra.mxu0 0
        %743 = vmatprep.subr.bf16.mxu0 0
        %744 = vmatpush1.bf16.xpose.msra.mxu0 0
        %745 = vmatprep.subr.bf16.mxu0 0
        %746 = vmatpush1.bf16.xpose.msra.mxu0 0
        %747 = vmatprep.subr.bf16.mxu0 0
        %748 = vmatpush1.bf16.xpose.msra.mxu0 0
        %749 = vmatprep.subr.bf16.mxu0 0
        %750 = vmatpush1.bf16.xpose.msra.mxu0 0
        %751 = vmatprep.subr.bf16.mxu0 0
        %752 = vmatpush1.bf16.xpose.msra.mxu0 0
        %753 = vmatprep.subr.bf16.mxu0 0
        %754 = vmatpush1.bf16.xpose.msra.mxu0 0
        %755 = vmatprep.subr.bf16.mxu0 0
        %756 = vmatpush1.bf16.xpose.msra.mxu0 0
        %757 = vmatprep.subr.bf16.mxu0 0
        %758 = vmatpush1.bf16.xpose.msra.mxu0 0
        %759 = vmatprep.subr.bf16.mxu0 0
        %760 = vmatpush1.bf16.xpose.msra.mxu0 0
        %761 = vmatprep.subr.bf16.mxu0 0
        %762 = vmatpush1.bf16.xpose.msra.mxu0 0
        %763 = vmatprep.subr.bf16.mxu0 0
        %764 = vmatpush1.bf16.xpose.msra.mxu0 0
        %765 = vmatprep.mubr.bf16.mxu0 0
        %766 = vmatmul.mubr.bf16.gmra.mrb[0].mxu0 %v728
        %v767 = vpop.f32.mrb[0].mxu0
        %v768 = vadd.f32 %v724, %v767
        %v769 = vpop.f32.mrb[0].mxu0
        %v770 = vpop.f32.mrb[0].mxu0
        %v771 = vadd.f32 %v724, %v770
        %v772 = vpop.f32.mrb[0].mxu0
        %773 = vdwg.mxu0
        %vm774 = vcmask 130048
        %v775 = vsel %vm774, %v768, -inf
        %776 = vmax.xlane.f32.xlu0 %v775
        %v777 = vpop.xlane.xlu0 %776
        %v778 = vsel %vm774, %v771, -inf
        %779 = vmax.xlane.f32.xlu0 %v778
        %v780 = vpop.xlane.xlu0 %779
        %v781 = vsub.f32 %v768, %v777
        %v782 = vsub.f32 %v771, %v780
        %v783 = vmul.f32 %v781, 1.442695
        %v784 = vpow.pop %v783
        %v785 = vmul.f32 %v782, 1.442695
        %v786 = vpow.pop %v785
        %v787 = vsel %vm774, %v784, 0.0
        %788 = vadd.xlane.f32.xlu0 %v787
        %v789 = vpop.xlane.xlu0 %788
        %v790 = vsel %vm774, %v786, 0.0
        %791 = vadd.xlane.f32.xlu0 %v790
        %v792 = vpop.xlane.xlu0 %791
        %v793 = vpack.c.bf16 %v786, %v784
        %v795 = vsel %vm774, %v793, 0
        %797 = vmatprep.subr.bf16.mxu0 0
        %798 = vmatpush1.bf16.msra.mxu0 %v719
        %799 = vmatprep.subr.bf16.mxu0 0
        %800 = vmatpush1.bf16.msra.mxu0 0
        %801 = vmatprep.subr.bf16.mxu0 0
        %802 = vmatpush1.bf16.msra.mxu0 0
        %803 = vmatprep.subr.bf16.mxu0 0
        %804 = vmatpush1.bf16.msra.mxu0 0
        %805 = vmatprep.subr.bf16.mxu0 0
        %806 = vmatpush1.bf16.msra.mxu0 0
        %807 = vmatprep.subr.bf16.mxu0 0
        %808 = vmatpush1.bf16.msra.mxu0 0
        %809 = vmatprep.subr.bf16.mxu0 0
        %810 = vmatpush1.bf16.msra.mxu0 0
        %811 = vmatprep.subr.bf16.mxu0 0
        %812 = vmatpush1.bf16.msra.mxu0 0
        %813 = vmatprep.subr.bf16.mxu0 0
        %814 = vmatpush1.bf16.msra.mxu0 0
        %815 = vmatprep.subr.bf16.mxu0 0
        %816 = vmatpush1.bf16.msra.mxu0 0
        %817 = vmatprep.subr.bf16.mxu0 0
        %818 = vmatpush1.bf16.msra.mxu0 0
        %819 = vmatprep.subr.bf16.mxu0 0
        %820 = vmatpush1.bf16.msra.mxu0 0
        %821 = vmatprep.subr.bf16.mxu0 0
        %822 = vmatpush1.bf16.msra.mxu0 0
        %823 = vmatprep.subr.bf16.mxu0 0
        %824 = vmatpush1.bf16.msra.mxu0 0
        %825 = vmatprep.subr.bf16.mxu0 0
        %826 = vmatpush1.bf16.msra.mxu0 0
        %827 = vmatprep.subr.bf16.mxu0 0
        %828 = vmatpush1.bf16.msra.mxu0 0
        %829 = vmatprep.mubr.bf16.mxu0 0
        %830 = vmatmul.mubr.bf16.gmra.mrb[0].mxu0 %v795
        %v831 = vpop.f32.mrb[0].mxu0
        %v832 = vadd.f32 0.0, %v831
        %v833 = vpop.f32.mrb[0].mxu0
        %v834 = vpop.f32.mrb[0].mxu0
        %v835 = vadd.f32 0.0, %v834
        %v836 = vpop.f32.mrb[0].mxu0
        %837 = vdwg.mxu0
        %v838 = vrcp.pop %v789
        %v839 = vrcp.pop %v792
        %v840 = vmul.f32 %v832, %v838
        %v841 = vmul.f32 %v835, %v839
        %842 = vst.msk [vmem:[#allocation2] sm:$0xff] %vm726, %v840
        %843 = vst.msk [vmem:[#allocation2 + $0x8] sm:$0xff] %vm726, %v841
        %845 = vrot.lane.b32.xlu0 %v717, 96
        %v846 = vpop.permute.xlu0 %845
        %848 = vrot.lane.b32.xlu0 %v718, 96
        %v849 = vpop.permute.xlu0 %848
        %v851 = vsel %vm726, %v846, 0
        %v854 = vsel %vm726, %v849, 0
        %856 = vmatprep.subr.bf16.mxu0 0
        %857 = vmatpush1.bf16.xpose.msra.mxu0 %v854
        %858 = vmatprep.subr.bf16.mxu0 0
        %859 = vmatpush1.bf16.xpose.msra.mxu0 0
        %860 = vmatprep.subr.bf16.mxu0 0
        %861 = vmatpush1.bf16.xpose.msra.mxu0 0
        %862 = vmatprep.subr.bf16.mxu0 0
        %863 = vmatpush1.bf16.xpose.msra.mxu0 0
        %864 = vmatprep.subr.bf16.mxu0 0
        %865 = vmatpush1.bf16.xpose.msra.mxu0 0
        %866 = vmatprep.subr.bf16.mxu0 0
        %867 = vmatpush1.bf16.xpose.msra.mxu0 0
        %868 = vmatprep.subr.bf16.mxu0 0
        %869 = vmatpush1.bf16.xpose.msra.mxu0 0
        %870 = vmatprep.subr.bf16.mxu0 0
        %871 = vmatpush1.bf16.xpose.msra.mxu0 0
        %872 = vmatprep.subr.bf16.mxu0 0
        %873 = vmatpush1.bf16.xpose.msra.mxu0 0
        %874 = vmatprep.subr.bf16.mxu0 0
        %875 = vmatpush1.bf16.xpose.msra.mxu0 0
        %876 = vmatprep.subr.bf16.mxu0 0
        %877 = vmatpush1.bf16.xpose.msra.mxu0 0
        %878 = vmatprep.subr.bf16.mxu0 0
        %879 = vmatpush1.bf16.xpose.msra.mxu0 0
        %880 = vmatprep.subr.bf16.mxu0 0
        %881 = vmatpush1.bf16.xpose.msra.mxu0 0
        %882 = vmatprep.subr.bf16.mxu0 0
        %883 = vmatpush1.bf16.xpose.msra.mxu0 0
        %884 = vmatprep.subr.bf16.mxu0 0
        %885 = vmatpush1.bf16.xpose.msra.mxu0 0
        %886 = vmatprep.subr.bf16.mxu0 0
        %887 = vmatpush1.bf16.xpose.msra.mxu0 0
        %888 = vmatprep.mubr.bf16.mxu0 0
        %889 = vmatmul.mubr.bf16.gmra.mrb[0].mxu0 %v851
        %v890 = vpop.f32.mrb[0].mxu0
        %v891 = vadd.f32 %v724, %v890
        %v892 = vpop.f32.mrb[0].mxu0
        %v893 = vpop.f32.mrb[0].mxu0
        %v894 = vadd.f32 %v724, %v893
        %v895 = vpop.f32.mrb[0].mxu0
        %896 = vdwg.mxu0
        %v897 = vsel %vm774, %v891, -inf
        %898 = vmax.xlane.f32.xlu0 %v897
        %v899 = vpop.xlane.xlu0 %898
        %v900 = vsel %vm774, %v894, -inf
        %901 = vmax.xlane.f32.xlu0 %v900
        %v902 = vpop.xlane.xlu0 %901
        %v903 = vsub.f32 %v891, %v899
        %v904 = vsub.f32 %v894, %v902
        %v905 = vmul.f32 %v903, 1.442695
        %v906 = vpow.pop %v905
        %v907 = vmul.f32 %v904, 1.442695
        %v908 = vpow.pop %v907
        %v909 = vsel %vm774, %v906, 0.0
        %910 = vadd.xlane.f32.xlu0 %v909
        %v911 = vpop.xlane.xlu0 %910
        %v912 = vsel %vm774, %v908, 0.0
        %913 = vadd.xlane.f32.xlu0 %v912
        %v914 = vpop.xlane.xlu0 %913
        %v915 = vpack.c.bf16 %v908, %v906
        %917 = vrot.lane.b32.xlu0 %v719, 96
        %v918 = vpop.permute.xlu0 %917
        %v921 = vsel %vm774, %v915, 0
        %923 = vmatprep.subr.bf16.mxu0 0
        %924 = vmatpush1.bf16.msra.mxu0 %v918
        %925 = vmatprep.subr.bf16.mxu0 0
        %926 = vmatpush1.bf16.msra.mxu0 0
        %927 = vmatprep.subr.bf16.mxu0 0
        %928 = vmatpush1.bf16.msra.mxu0 0
        %929 = vmatprep.subr.bf16.mxu0 0
        %930 = vmatpush1.bf16.msra.mxu0 0
        %931 = vmatprep.subr.bf16.mxu0 0
        %932 = vmatpush1.bf16.msra.mxu0 0
        %933 = vmatprep.subr.bf16.mxu0 0
        %934 = vmatpush1.bf16.msra.mxu0 0
        %935 = vmatprep.subr.bf16.mxu0 0
        %936 = vmatpush1.bf16.msra.mxu0 0
        %937 = vmatprep.subr.bf16.mxu0 0
        %938 = vmatpush1.bf16.msra.mxu0 0
        %939 = vmatprep.subr.bf16.mxu0 0
        %940 = vmatpush1.bf16.msra.mxu0 0
        %941 = vmatprep.subr.bf16.mxu0 0
        %942 = vmatpush1.bf16.msra.mxu0 0
        %943 = vmatprep.subr.bf16.mxu0 0
        %944 = vmatpush1.bf16.msra.mxu0 0
        %945 = vmatprep.subr.bf16.mxu0 0
        %946 = vmatpush1.bf16.msra.mxu0 0
        %947 = vmatprep.subr.bf16.mxu0 0
        %948 = vmatpush1.bf16.msra.mxu0 0
        %949 = vmatprep.subr.bf16.mxu0 0
        %950 = vmatpush1.bf16.msra.mxu0 0
        %951 = vmatprep.subr.bf16.mxu0 0
        %952 = vmatpush1.bf16.msra.mxu0 0
        %953 = vmatprep.subr.bf16.mxu0 0
        %954 = vmatpush1.bf16.msra.mxu0 0
        %955 = vmatprep.mubr.bf16.mxu0 0
        %956 = vmatmul.mubr.bf16.gmra.mrb[0].mxu0 %v921
        %v957 = vpop.f32.mrb[0].mxu0
        %v958 = vadd.f32 0.0, %v957
        %v959 = vpop.f32.mrb[0].mxu0
        %v960 = vpop.f32.mrb[0].mxu0
        %v961 = vadd.f32 0.0, %v960
        %v962 = vpop.f32.mrb[0].mxu0
        %963 = vdwg.mxu0
        %v964 = vrcp.pop %v911
        %v965 = vrcp.pop %v914
        %v966 = vmul.f32 %v958, %v964
        %v967 = vmul.f32 %v961, %v965
        %970 = vrot.lane.b32.xlu0 %v966, 32
        %v971 = vpop.permute.xlu0 %970
        %972 = vrot.lane.b32.xlu0 %v967, 32
        %v973 = vpop.permute.xlu0 %972
        %vm976 = vcmask 523520
        %977 = vst.msk [vmem:[#allocation2] sm:$0xff] %vm976, %v971
        %978 = vst.msk [vmem:[#allocation2 + $0x8] sm:$0xff] %vm976, %v973
        %979 = vrot.lane.b32.xlu0 %v717, 64
        %v980 = vpop.permute.xlu0 %979
        %981 = vrot.lane.b32.xlu0 %v718, 64
        %v982 = vpop.permute.xlu0 %981
        %v984 = vsel %vm726, %v980, 0
        %v987 = vsel %vm726, %v982, 0
        %989 = vmatprep.subr.bf16.mxu0 0
        %990 = vmatpush1.bf16.xpose.msra.mxu0 %v987
        %991 = vmatprep.subr.bf16.mxu0 0
        %992 = vmatpush1.bf16.xpose.msra.mxu0 0
        %993 = vmatprep.subr.bf16.mxu0 0
        %994 = vmatpush1.bf16.xpose.msra.mxu0 0
        %995 = vmatprep.subr.bf16.mxu0 0
        %996 = vmatpush1.bf16.xpose.msra.mxu0 0
        %997 = vmatprep.subr.bf16.mxu0 0
        %998 = vmatpush1.bf16.xpose.msra.mxu0 0
        %999 = vmatprep.subr.bf16.mxu0 0
        %1000 = vmatpush1.bf16.xpose.msra.mxu0 0
        %1001 = vmatprep.subr.bf16.mxu0 0
        %1002 = vmatpush1.bf16.xpose.msra.mxu0 0
        %1003 = vmatprep.subr.bf16.mxu0 0
        %1004 = vmatpush1.bf16.xpose.msra.mxu0 0
        %1005 = vmatprep.subr.bf16.mxu0 0
        %1006 = vmatpush1.bf16.xpose.msra.mxu0 0
        %1007 = vmatprep.subr.bf16.mxu0 0
        %1008 = vmatpush1.bf16.xpose.msra.mxu0 0
        %1009 = vmatprep.subr.bf16.mxu0 0
        %1010 = vmatpush1.bf16.xpose.msra.mxu0 0
        %1011 = vmatprep.subr.bf16.mxu0 0
        %1012 = vmatpush1.bf16.xpose.msra.mxu0 0
        %1013 = vmatprep.subr.bf16.mxu0 0
        %1014 = vmatpush1.bf16.xpose.msra.mxu0 0
        %1015 = vmatprep.subr.bf16.mxu0 0
        %1016 = vmatpush1.bf16.xpose.msra.mxu0 0
        %1017 = vmatprep.subr.bf16.mxu0 0
        %1018 = vmatpush1.bf16.xpose.msra.mxu0 0
        %1019 = vmatprep.subr.bf16.mxu0 0
        %1020 = vmatpush1.bf16.xpose.msra.mxu0 0
        %1021 = vmatprep.mubr.bf16.mxu0 0
        %1022 = vmatmul.mubr.bf16.gmra.mrb[0].mxu0 %v984
        %v1023 = vpop.f32.mrb[0].mxu0
        %v1024 = vadd.f32 %v724, %v1023
        %v1025 = vpop.f32.mrb[0].mxu0
        %v1026 = vpop.f32.mrb[0].mxu0
        %v1027 = vadd.f32 %v724, %v1026
        %v1028 = vpop.f32.mrb[0].mxu0
        %1029 = vdwg.mxu0
        %v1030 = vsel %vm774, %v1024, -inf
        %1031 = vmax.xlane.f32.xlu0 %v1030
        %v1032 = vpop.xlane.xlu0 %1031
        %v1033 = vsel %vm774, %v1027, -inf
        %1034 = vmax.xlane.f32.xlu0 %v1033
        %v1035 = vpop.xlane.xlu0 %1034
        %v1036 = vsub.f32 %v1024, %v1032
        %v1037 = vsub.f32 %v1027, %v1035
        %v1038 = vmul.f32 %v1036, 1.442695
        %v1039 = vpow.pop %v1038
        %v1040 = vmul.f32 %v1037, 1.442695
        %v1041 = vpow.pop %v1040
        %v1042 = vsel %vm774, %v1039, 0.0
        %1043 = vadd.xlane.f32.xlu0 %v1042
        %v1044 = vpop.xlane.xlu0 %1043
        %v1045 = vsel %vm774, %v1041, 0.0
        %1046 = vadd.xlane.f32.xlu0 %v1045
        %v1047 = vpop.xlane.xlu0 %1046
        %v1048 = vpack.c.bf16 %v1041, %v1039
        %1049 = vrot.lane.b32.xlu0 %v719, 64
        %v1050 = vpop.permute.xlu0 %1049
        %v1053 = vsel %vm774, %v1048, 0
        %1055 = vmatprep.subr.bf16.mxu0 0
        %1056 = vmatpush1.bf16.msra.mxu0 %v1050
        %1057 = vmatprep.subr.bf16.mxu0 0
        %1058 = vmatpush1.bf16.msra.mxu0 0
        %1059 = vmatprep.subr.bf16.mxu0 0
        %1060 = vmatpush1.bf16.msra.mxu0 0
        %1061 = vmatprep.subr.bf16.mxu0 0
        %1062 = vmatpush1.bf16.msra.mxu0 0
        %1063 = vmatprep.subr.bf16.mxu0 0
        %1064 = vmatpush1.bf16.msra.mxu0 0
        %1065 = vmatprep.subr.bf16.mxu0 0
        %1066 = vmatpush1.bf16.msra.mxu0 0
        %1067 = vmatprep.subr.bf16.mxu0 0
        %1068 = vmatpush1.bf16.msra.mxu0 0
        %1069 = vmatprep.subr.bf16.mxu0 0
        %1070 = vmatpush1.bf16.msra.mxu0 0
        %1071 = vmatprep.subr.bf16.mxu0 0
        %1072 = vmatpush1.bf16.msra.mxu0 0
        %1073 = vmatprep.subr.bf16.mxu0 0
        %1074 = vmatpush1.bf16.msra.mxu0 0
        %1075 = vmatprep.subr.bf16.mxu0 0
        %1076 = vmatpush1.bf16.msra.mxu0 0
        %1077 = vmatprep.subr.bf16.mxu0 0
        %1078 = vmatpush1.bf16.msra.mxu0 0
        %1079 = vmatprep.subr.bf16.mxu0 0
        %1080 = vmatpush1.bf16.msra.mxu0 0
        %1081 = vmatprep.subr.bf16.mxu0 0
        %1082 = vmatpush1.bf16.msra.mxu0 0
        %1083 = vmatprep.subr.bf16.mxu0 0
        %1084 = vmatpush1.bf16.msra.mxu0 0
        %1085 = vmatprep.subr.bf16.mxu0 0
        %1086 = vmatpush1.bf16.msra.mxu0 0
        %1087 = vmatprep.mubr.bf16.mxu0 0
        %1088 = vmatmul.mubr.bf16.gmra.mrb[0].mxu0 %v1053
        %v1089 = vpop.f32.mrb[0].mxu0
        %v1090 = vadd.f32 0.0, %v1089
        %v1091 = vpop.f32.mrb[0].mxu0
        %v1092 = vpop.f32.mrb[0].mxu0
        %v1093 = vadd.f32 0.0, %v1092
        %v1094 = vpop.f32.mrb[0].mxu0
        %1095 = vdwg.mxu0
        %v1096 = vrcp.pop %v1044
        %v1097 = vrcp.pop %v1047
        %v1098 = vmul.f32 %v1090, %v1096
        %v1099 = vmul.f32 %v1093, %v1097
        %1102 = vrot.lane.b32.xlu0 %v1098, 64
        %v1103 = vpop.permute.xlu0 %1102
        %1104 = vrot.lane.b32.xlu0 %v1099, 64
        %v1105 = vpop.permute.xlu0 %1104
        %vm1108 = vcmask 785920
        %1109 = vst.msk [vmem:[#allocation2] sm:$0xff] %vm1108, %v1103
        %1110 = vst.msk [vmem:[#allocation2 + $0x8] sm:$0xff] %vm1108, %v1105
        %1111 = vrot.lane.b32.xlu0 %v717, 32
        %v1112 = vpop.permute.xlu0 %1111
        %1113 = vrot.lane.b32.xlu0 %v718, 32
        %v1114 = vpop.permute.xlu0 %1113
        %v1116 = vsel %vm726, %v1112, 0
        %v1119 = vsel %vm726, %v1114, 0
        %1121 = vmatprep.subr.bf16.mxu0 0
        %1122 = vmatpush1.bf16.xpose.msra.mxu0 %v1119
        %1123 = vmatprep.subr.bf16.mxu0 0
        %1124 = vmatpush1.bf16.xpose.msra.mxu0 0
        %1125 = vmatprep.subr.bf16.mxu0 0
        %1126 = vmatpush1.bf16.xpose.msra.mxu0 0
        %1127 = vmatprep.subr.bf16.mxu0 0
        %1128 = vmatpush1.bf16.xpose.msra.mxu0 0
        %1129 = vmatprep.subr.bf16.mxu0 0
        %1130 = vmatpush1.bf16.xpose.msra.mxu0 0
        %1131 = vmatprep.subr.bf16.mxu0 0
        %1132 = vmatpush1.bf16.xpose.msra.mxu0 0
        %1133 = vmatprep.subr.bf16.mxu0 0
        %1134 = vmatpush1.bf16.xpose.msra.mxu0 0
        %1135 = vmatprep.subr.bf16.mxu0 0
        %1136 = vmatpush1.bf16.xpose.msra.mxu0 0
        %1137 = vmatprep.subr.bf16.mxu0 0
        %1138 = vmatpush1.bf16.xpose.msra.mxu0 0
        %1139 = vmatprep.subr.bf16.mxu0 0
        %1140 = vmatpush1.bf16.xpose.msra.mxu0 0
        %1141 = vmatprep.subr.bf16.mxu0 0
        %1142 = vmatpush1.bf16.xpose.msra.mxu0 0
        %1143 = vmatprep.subr.bf16.mxu0 0
        %1144 = vmatpush1.bf16.xpose.msra.mxu0 0
        %1145 = vmatprep.subr.bf16.mxu0 0
        %1146 = vmatpush1.bf16.xpose.msra.mxu0 0
        %1147 = vmatprep.subr.bf16.mxu0 0
        %1148 = vmatpush1.bf16.xpose.msra.mxu0 0
        %1149 = vmatprep.subr.bf16.mxu0 0
        %1150 = vmatpush1.bf16.xpose.msra.mxu0 0
        %1151 = vmatprep.subr.bf16.mxu0 0
        %1152 = vmatpush1.bf16.xpose.msra.mxu0 0
        %1153 = vmatprep.mubr.bf16.mxu0 0
        %1154 = vmatmul.mubr.bf16.gmra.mrb[0].mxu0 %v1116
        %v1155 = vpop.f32.mrb[0].mxu0
        %v1156 = vadd.f32 %v724, %v1155
        %v1157 = vpop.f32.mrb[0].mxu0
        %v1158 = vpop.f32.mrb[0].mxu0
        %v1159 = vadd.f32 %v724, %v1158
        %v1160 = vpop.f32.mrb[0].mxu0
        %1161 = vdwg.mxu0
        %v1162 = vsel %vm774, %v1156, -inf
        %1163 = vmax.xlane.f32.xlu0 %v1162
        %v1164 = vpop.xlane.xlu0 %1163
        %v1165 = vsel %vm774, %v1159, -inf
        %1166 = vmax.xlane.f32.xlu0 %v1165
        %v1167 = vpop.xlane.xlu0 %1166
        %v1168 = vsub.f32 %v1156, %v1164
        %v1169 = vsub.f32 %v1159, %v1167
        %v1170 = vmul.f32 %v1168, 1.442695
        %v1171 = vpow.pop %v1170
        %v1172 = vmul.f32 %v1169, 1.442695
        %v1173 = vpow.pop %v1172
        %v1174 = vsel %vm774, %v1171, 0.0
        %1175 = vadd.xlane.f32.xlu0 %v1174
        %v1176 = vpop.xlane.xlu0 %1175
        %v1177 = vsel %vm774, %v1173, 0.0
        %1178 = vadd.xlane.f32.xlu0 %v1177
        %v1179 = vpop.xlane.xlu0 %1178
        %v1180 = vpack.c.bf16 %v1173, %v1171
        %1181 = vrot.lane.b32.xlu0 %v719, 32
        %v1182 = vpop.permute.xlu0 %1181
        %v1185 = vsel %vm774, %v1180, 0
        %1187 = vmatprep.subr.bf16.mxu0 0
        %1188 = vmatpush1.bf16.msra.mxu0 %v1182
        %1189 = vmatprep.subr.bf16.mxu0 0
        %1190 = vmatpush1.bf16.msra.mxu0 0
        %1191 = vmatprep.subr.bf16.mxu0 0
        %1192 = vmatpush1.bf16.msra.mxu0 0
        %1193 = vmatprep.subr.bf16.mxu0 0
        %1194 = vmatpush1.bf16.msra.mxu0 0
        %1195 = vmatprep.subr.bf16.mxu0 0
        %1196 = vmatpush1.bf16.msra.mxu0 0
        %1197 = vmatprep.subr.bf16.mxu0 0
        %1198 = vmatpush1.bf16.msra.mxu0 0
        %1199 = vmatprep.subr.bf16.mxu0 0
        %1200 = vmatpush1.bf16.msra.mxu0 0
        %1201 = vmatprep.subr.bf16.mxu0 0
        %1202 = vmatpush1.bf16.msra.mxu0 0
        %1203 = vmatprep.subr.bf16.mxu0 0
        %1204 = vmatpush1.bf16.msra.mxu0 0
        %1205 = vmatprep.subr.bf16.mxu0 0
        %1206 = vmatpush1.bf16.msra.mxu0 0
        %1207 = vmatprep.subr.bf16.mxu0 0
        %1208 = vmatpush1.bf16.msra.mxu0 0
        %1209 = vmatprep.subr.bf16.mxu0 0
        %1210 = vmatpush1.bf16.msra.mxu0 0
        %1211 = vmatprep.subr.bf16.mxu0 0
        %1212 = vmatpush1.bf16.msra.mxu0 0
        %1213 = vmatprep.subr.bf16.mxu0 0
        %1214 = vmatpush1.bf16.msra.mxu0 0
        %1215 = vmatprep.subr.bf16.mxu0 0
        %1216 = vmatpush1.bf16.msra.mxu0 0
        %1217 = vmatprep.subr.bf16.mxu0 0
        %1218 = vmatpush1.bf16.msra.mxu0 0
        %1219 = vmatprep.mubr.bf16.mxu0 0
        %1220 = vmatmul.mubr.bf16.gmra.mrb[0].mxu0 %v1185
        %v1221 = vpop.f32.mrb[0].mxu0
        %v1222 = vadd.f32 0.0, %v1221
        %v1223 = vpop.f32.mrb[0].mxu0
        %v1224 = vpop.f32.mrb[0].mxu0
        %v1225 = vadd.f32 0.0, %v1224
        %v1226 = vpop.f32.mrb[0].mxu0
        %1227 = vdwg.mxu0
        %v1228 = vrcp.pop %v1176
        %v1229 = vrcp.pop %v1179
        %v1230 = vmul.f32 %v1222, %v1228
        %v1231 = vmul.f32 %v1225, %v1229
        %1234 = vrot.lane.b32.xlu0 %v1230, 96
        %v1235 = vpop.permute.xlu0 %1234
        %1236 = vrot.lane.b32.xlu0 %v1231, 96
        %v1237 = vpop.permute.xlu0 %1236
        %vm1240 = vcmask 1048320
        %1241 = vst.msk [vmem:[#allocation2] sm:$0xff] %vm1240, %v1235
        %1242 = vst.msk [vmem:[#allocation2 + $0x8] sm:$0xff] %vm1240, %v1237
        %v1243 = vld [vmem:[#allocation2] sm:$0xff]
        %v1244 = vld [vmem:[#allocation2 + $0x8] sm:$0xff]
        %v1245 = vpack.c.bf16 %v1244, %v1243
        %v1246 = vld [vmem:[#allocation12] sm:$0xf]
        %v1247 = vld [vmem:[#allocation12 + $0x4] sm:$0xf]
        %v1248 = vld [vmem:[#allocation12 + $0x8] sm:$0xf]
        %v1249 = vld [vmem:[#allocation12 + $0xc] sm:$0xf]
        %v1250 = vld [vmem:[#allocation12 + $0x10] sm:$0xf]
        %v1251 = vld [vmem:[#allocation12 + $0x14] sm:$0xf]
        %v1252 = vld [vmem:[#allocation12 + $0x18] sm:$0xf]
        %v1253 = vld [vmem:[#allocation12 + $0x1c] sm:$0xf]
        %v1254 = vld [vmem:[#allocation12 + $0x20] sm:$0xf]
        %v1255 = vld [vmem:[#allocation12 + $0x24] sm:$0xf]
        %v1256 = vld [vmem:[#allocation12 + $0x28] sm:$0xf]
        %v1257 = vld [vmem:[#allocation12 + $0x2c] sm:$0xf]
        %v1258 = vld [vmem:[#allocation12 + $0x30] sm:$0xf]
        %v1259 = vld [vmem:[#allocation12 + $0x34] sm:$0xf]
        %v1260 = vld [vmem:[#allocation12 + $0x38] sm:$0xf]
        %v1261 = vld [vmem:[#allocation12 + $0x3c] sm:$0xf]
        %v1262 = vld [vmem:[#allocation14] sm:$0x1]
        %v1264 = vlaneseq
        %v1265 = vshrl.u32 %v1264, 7
        %v1266 = vsub.s32 0, %v1265
        %v1267 = vrot.slane %v1262, %v1266
        %v1285 = vunpack.c.l.b16 %v1246
        %v1286 = vunpack.c.l.b16 %v1247
        %v1287 = vunpack.c.l.b16 %v1248
        %v1288 = vunpack.c.l.b16 %v1249
        %v1289 = vunpack.c.l.b16 %v1250
        %v1290 = vunpack.c.l.b16 %v1251
        %v1291 = vunpack.c.l.b16 %v1252
        %v1292 = vunpack.c.l.b16 %v1253
        %v1293 = vunpack.c.l.b16 %v1254
        %v1294 = vunpack.c.l.b16 %v1255
        %v1295 = vunpack.c.l.b16 %v1256
        %v1296 = vunpack.c.l.b16 %v1257
        %v1297 = vunpack.c.l.b16 %v1258
        %v1298 = vunpack.c.l.b16 %v1259
        %v1299 = vunpack.c.l.b16 %v1260
        %v1300 = vunpack.c.l.b16 %v1261
        %v1301 = vpack.c.b16 %v1286, %v1285
        %v1302 = vpack.c.b16 %v1288, %v1287
        %v1303 = vpack.c.b16 %v1290, %v1289
        %v1304 = vpack.c.b16 %v1292, %v1291
        %v1305 = vpack.c.b16 %v1294, %v1293
        %v1306 = vpack.c.b16 %v1296, %v1295
        %v1307 = vpack.c.b16 %v1298, %v1297
        %v1308 = vpack.c.b16 %v1300, %v1299
        %1317 = vmatprep.subr.bf16.mxu0 0
        %1318 = vmatpush1.bf16.msra.mxu0 %v1301
        %1319 = vmatprep.subr.bf16.mxu0 0
        %1320 = vmatpush1.bf16.msra.mxu0 %v1302
        %1321 = vmatprep.subr.bf16.mxu0 0
        %1322 = vmatpush1.bf16.msra.mxu0 %v1303
        %1323 = vmatprep.subr.bf16.mxu0 0
        %1324 = vmatpush1.bf16.msra.mxu0 %v1304
        %1325 = vmatprep.subr.bf16.mxu0 0
        %1326 = vmatpush1.bf16.msra.mxu0 %v1305
        %1327 = vmatprep.subr.bf16.mxu0 0
        %1328 = vmatpush1.bf16.msra.mxu0 %v1306
        %1329 = vmatprep.subr.bf16.mxu0 0
        %1330 = vmatpush1.bf16.msra.mxu0 %v1307
        %1331 = vmatprep.subr.bf16.mxu0 0
        %1332 = vmatpush1.bf16.msra.mxu0 %v1308
        %1333 = vmatprep.subr.bf16.mxu0 0
        %1334 = vmatpush1.bf16.msra.mxu0 0
        %1335 = vmatprep.subr.bf16.mxu0 0
        %1336 = vmatpush1.bf16.msra.mxu0 0
        %1337 = vmatprep.subr.bf16.mxu0 0
        %1338 = vmatpush1.bf16.msra.mxu0 0
        %1339 = vmatprep.subr.bf16.mxu0 0
        %1340 = vmatpush1.bf16.msra.mxu0 0
        %1341 = vmatprep.subr.bf16.mxu0 0
        %1342 = vmatpush1.bf16.msra.mxu0 0
        %1343 = vmatprep.subr.bf16.mxu0 0
        %1344 = vmatpush1.bf16.msra.mxu0 0
        %1345 = vmatprep.subr.bf16.mxu0 0
        %1346 = vmatpush1.bf16.msra.mxu0 0
        %1347 = vmatprep.subr.bf16.mxu0 0
        %1348 = vmatpush1.bf16.msra.mxu0 0
        %1349 = vmatprep.mubr.bf16.mxu0 0
        %1350 = vmatmul.mubr.bf16.gmra.mrb[0].mxu0 %v1245
        %v1351 = vpop.f32.mrb[0].mxu0
        %v1352 = vadd.f32 %v1267, %v1351
        %v1353 = vpop.f32.mrb[0].mxu0
        %v1354 = vpop.f32.mrb[0].mxu0
        %v1355 = vadd.f32 %v1267, %v1354
        %v1356 = vpop.f32.mrb[0].mxu0
        %1357 = vdwg.mxu0
        %1358 = vst [vmem:[%s439] sm:$0xff] %v1352
        %1359 = vst [vmem:[%s439 + $0x8] sm:$0xff] %v1355
        %s1360 = sand.u32 %s215, 1
        %s1361 = scalar_lea.sflag [#allocation5], %s1360
        %s1362 = sand.u32 %s215, 1
        %s1363 = smul.addr %s1362, 16
        %s1364 = scalar_lea.vmem [#allocation15], %s1363
        // Predicated region
        $region77: #{tpu_custom_call.1} parent=47 // pred_check
          %p1365 = pneg %p225
        $region78: #{tpu_custom_call.1} parent=47 // pred_check_branch
          %1367 = sbr.rel (%p1365) target = $region80
        $region79: #{tpu_custom_call.1} parent=47 // pred_region
          %s1368 = smul.u32 2, %s34
          %s1370 = ssub.s32 256, 256
          %1371 = vsyncadd %s1361, %s1370
          %s1372 = smul.addr %s33, 2
          %s1373 = sadd.s32 %s1368, %s1372
          %s1374 = smul.addr %s1373, 128
          %s1375 = scalar_lea.hbm %s7, %s1374
          %s1376 = sshll.u32 %s1364, 4
          %s1377 = int_to_ptr.vmem [resolvable:$true] %s1376
          %1382 = dma.vmem_to_hbm [thread:$0]  %s1377, 256, %s1375, %s1361, 128, 128, 8
        $region80: #{tpu_custom_call.1} parent=47 // pred_fallthru
          _
      $region48: #{tpu_custom_call.1} parent=5 // pred_fallthru
        _
      %p1383 = scmp.le.s32.totalorder 2, %s24
      // Predicated region
      $region81: #{tpu_custom_call.1} parent=5 // pred_check
        %p1384 = pneg %p1383
      $region82: #{tpu_custom_call.1} parent=5 // pred_check_branch
        %1386 = sbr.rel (%p1384) target = $region84
      $region83: #{tpu_custom_call.1} parent=5 // pred_region
        %s1387 = ssub.s32 %s24, 2
        // Predicated region
        $region85: #{tpu_custom_call.1} parent=83 // pred_check
          %p1388 = pneg %p231
        $region86: #{tpu_custom_call.1} parent=83 // pred_check_branch
          %1390 = sbr.rel (%p1388) target = $region88
        $region87: #{tpu_custom_call.1} parent=83 // pred_region
          %s1391 = sand.u32 %s216, 1
          %s1392 = scalar_lea.sflag [#allocation5], %s1391
          %s1393 = sand.u32 %s216, 1
          %s1394 = smul.addr %s1393, 16
          %s1395 = scalar_lea.vmem [#allocation15], %s1394
          %1396 = dma.done %s1392, 256
        $region88: #{tpu_custom_call.1} parent=83 // pred_fallthru
          _
      $region84: #{tpu_custom_call.1} parent=5 // pred_fallthru
        _
    $region6: #{tpu_custom_call.1} parent=1 // loop_footer
      %s28 = sadd.s32 1, %s24
    $region7: #{tpu_custom_call.1} parent=1 // loop_footer_branch
      %23 = sbr.rel target = $region3
    $region8: #{tpu_custom_call.1} parent=1 // loop_exit
      _
    %1397 = vsyncpa [#allocation4], 1
    %s1398 = scalar_lea.sflag [#allocation4], 1
    %1399 = vsyncpa %s1398, 1
    %1400 = vsyncpa [#allocation7], 1
    %s1401 = scalar_lea.sflag [#allocation7], 1
    %1402 = vsyncpa %s1401, 1
    %1403 = vsyncpa [#allocation10], 1
    %1404 = vsyncpa [#allocation13], 1
    %1405 = vsyncpa [#allocation5], 1
    %s1406 = scalar_lea.sflag [#allocation5], 1
    %1407 = vsyncpa %s1406, 1

</llo_original>
